<compile_context>
chip_gen: v7x
topology: tpu7x:2x2x1
jax: 0.10.0
libtpu: 0.0.40
codegen_flags: <defaults>
</compile_context>

<pallas_src>
import functools

import jax
import jax.numpy as jnp
from jax import lax
from jax.experimental import pallas as pl
from jax.experimental.pallas import tpu as pltpu


# ---------------------------------------------------------------------------
# Fused kernel: one-hot embedding bags -> LSTM (last state) -> MLP head
# ---------------------------------------------------------------------------
def lstmnet_kernel(cat_idx_ref, amt_idx_ref, dt_idx_ref, id_idx_ref,
                   cat_tbl_ref, amt_tbl_ref, dt_tbl_ref, id_tbl_ref,
                   w_ih_ref, w_hh_ref, b_lstm_ref,
                   w1_ref, b1_ref, w2_ref, b2_ref,
                   o_ref, *, batch, hidden_pad):
    f32 = jnp.float32
    B, HP = batch, hidden_pad
    LB, M = cat_idx_ref.shape          # LB = L * B, time-major (row = t*B + b)
    L = LB // B
    VC1 = cat_tbl_ref.shape[0]         # cat_vocab_size + 1 (last row = padding)
    VA1 = amt_tbl_ref.shape[0]
    VD = dt_tbl_ref.shape[0]
    VI = id_tbl_ref.shape[0]

    # ---- embedding bags via in-kernel one-hot matmuls ----------------------
    cat_idx = cat_idx_ref[...]                                   # (LB, M) int32
    amt_idx = amt_idx_ref[...]
    # Reference semantics: the *cat* padding mask is applied to BOTH the cat
    # and the amount embedding bags (x_amount_emb * x_mask_cat).
    mask = (cat_idx != VC1 - 1).astype(f32)[:, :, None]          # (LB, M, 1)

    c_iota = lax.broadcasted_iota(jnp.int32, (LB, M, VC1), 2)
    cat_cnt = jnp.sum((cat_idx[:, :, None] == c_iota).astype(f32) * mask, axis=1)
    a_iota = lax.broadcasted_iota(jnp.int32, (LB, M, VA1), 2)
    amt_cnt = jnp.sum((amt_idx[:, :, None] == a_iota).astype(f32) * mask, axis=1)

    cat_sum = jnp.dot(cat_cnt, cat_tbl_ref[...], preferred_element_type=f32)  # (LB, E)
    amt_sum = jnp.dot(amt_cnt, amt_tbl_ref[...], preferred_element_type=f32)  # (LB, E)

    d_iota = lax.broadcasted_iota(jnp.int32, (LB, VD), 1)
    dt_emb = jnp.dot((dt_idx_ref[...] == d_iota).astype(f32), dt_tbl_ref[...],
                     preferred_element_type=f32)                               # (LB, E)

    i_iota = lax.broadcasted_iota(jnp.int32, (B, VI), 1)
    id_emb = jnp.dot((id_idx_ref[...] == i_iota).astype(f32), id_tbl_ref[...],
                     preferred_element_type=f32)                               # (B, E)

    # ---- hoisted input projection (off the serial dependency chain) --------
    x_seq = jnp.concatenate([cat_sum, amt_sum, dt_emb], axis=-1)               # (LB, 3E)
    xw = jnp.dot(x_seq, w_ih_ref[...],
                 preferred_element_type=f32) + b_lstm_ref[...]                 # (LB, 4HP)

    w_hh = w_hh_ref[...]                                                       # (HP, 4HP)
    h = jnp.zeros((B, HP), f32)
    c = jnp.zeros((B, HP), f32)

    # L is a small static constant -> fully unrolled in-kernel recurrence.
    # Gate layout (lane-aligned, 4*HP == 128): [i | f | o | g] at 0/HP/2HP/3HP.
    for t in range(L):
        pre = xw[t * B:(t + 1) * B, :] + jnp.dot(h, w_hh,
                                                 preferred_element_type=f32)   # (B, 4HP)
        sig = jax.nn.sigmoid(pre[:, :3 * HP])       # one EUP push over i,f,o lanes
        g_g = jnp.tanh(pre[:, 3 * HP:])             # one EUP push over g lanes
        i_g = sig[:, 0 * HP:1 * HP]
        f_g = sig[:, 1 * HP:2 * HP]
        o_g = sig[:, 2 * HP:3 * HP]
        c = f_g * c + i_g * g_g
        h = o_g * jnp.tanh(c)

    # ---- head: concat(h_T, id_emb) -> Linear -> ReLU -> Linear -------------
    x_concat = jnp.concatenate([h, id_emb], axis=-1)                           # (B, HP+E)
    hid = jnp.dot(x_concat, w1_ref[...], preferred_element_type=f32) + b1_ref[...]
    hid = jnp.maximum(hid, 0.0)
    o_ref[...] = (jnp.dot(hid, w2_ref[...], preferred_element_type=f32)
                  + b2_ref[...]).astype(o_ref.dtype)                           # (B, VP)


# ---------------------------------------------------------------------------
# Full forward (glue: flatten indices time-major, one pallas_call, unpad out)
# ---------------------------------------------------------------------------
def lstmnet_forward(params, cat_arr, dt_arr, amount_arr, id_arr, cat_vocab_size):
    B, L, M = cat_arr.shape
    LB = L * B
    HP = params["w_hh"].shape[0]       # padded hidden (4*HP is lane-aligned)
    VP = params["w2"].shape[1]         # padded output width (>= 128)

    # time-major flattened index arrays (row = t*B + b), int32
    cat_idx = cat_arr.transpose(1, 0, 2).reshape(LB, M).astype(jnp.int32)
    amt_idx = amount_arr.transpose(1, 0, 2).reshape(LB, M).astype(jnp.int32)
    dt_idx = dt_arr.transpose(1, 0).reshape(LB, 1).astype(jnp.int32)
    id_idx = id_arr.astype(jnp.int32)                                  # (B, 1)

    def full(shape):
        return pl.BlockSpec(shape, lambda i, _n=len(shape): (0,) * _n)

    args = (cat_idx, amt_idx, dt_idx, id_idx,
            params["cat_emb"], params["amount_emb"],
            params["dt_emb"], params["id_emb"],
            params["w_ih"], params["w_hh"], params["b_lstm"],
            params["w1"], params["b1"], params["w2"], params["b2"])

    kernel = functools.partial(lstmnet_kernel, batch=B, hidden_pad=HP)
    out = pl.pallas_call(
        kernel,
        out_shape=jax.ShapeDtypeStruct((B, VP), jnp.float32),
        grid=(1,),
        in_specs=[full(a.shape) for a in args],
        out_specs=full((B, VP)),
        compiler_params=pltpu.CompilerParams(
            dimension_semantics=("arbitrary",)),
    )(*args)
    return out[:, :cat_vocab_size]


# ---------------------------------------------------------------------------
# Deterministic parameters (torch-layout init, then packed/padded for the TPU)
# ---------------------------------------------------------------------------
def init_params(key, cat_vocab_size, id_vocab_size, amount_vocab_size,
                dt_vocab_size, emb_dim):
    E = emb_dim
    H = 3 * E                            # lstm_hidden_dim == lstm_input_dim == 3E
    IN = 3 * E
    HP = ((H + 31) // 32) * 32           # pad hidden so 4*HP is a multiple of 128
    V = cat_vocab_size
    VP = ((V + 127) // 128) * 128        # lane-dense output width
    keys = jax.random.split(key, 12)
    u = lambda k, shape, s: jax.random.uniform(k, shape, jnp.float32, -s, s)

    # embedding tables; padding rows of cat/amount are zero (padding_idx)
    cat_emb = jax.random.normal(keys[0], (cat_vocab_size + 1, E), jnp.float32)
    cat_emb = cat_emb.at[cat_vocab_size].set(0.0)
    amount_emb = jax.random.normal(keys[1], (amount_vocab_size + 1, E), jnp.float32)
    amount_emb = amount_emb.at[amount_vocab_size].set(0.0)
    id_emb = jax.random.normal(keys[2], (id_vocab_size, E), jnp.float32)
    dt_emb = jax.random.normal(keys[3], (dt_vocab_size, E), jnp.float32)

    # nn.LSTM weights in torch layout (gate order [i,f,g,o]), then packed:
    # reorder to [i,f,o,g], transpose, pad H->HP with EXACT zeros.
    s_lstm = 1.0 / (H ** 0.5)
    w_ih_t = u(keys[4], (4 * H, IN), s_lstm)    # torch weight_ih_l0
    w_hh_t = u(keys[5], (4 * H, H), s_lstm)     # torch weight_hh_l0
    b_t = u(keys[6], (4 * H,), s_lstm) + u(keys[7], (4 * H,), s_lstm)

    def pack_w(w, rows_pad):
        gi, gf, gg, go = jnp.split(w, 4, axis=0)          # each (H, rows)
        blocks = []
        for g in (gi, gf, go, gg):                        # gate order [i, f, o, g]
            gt = g.T                                      # (rows, H)
            gt = jnp.pad(gt, ((0, rows_pad - gt.shape[0]), (0, HP - H)))
            blocks.append(gt)
        return jnp.concatenate(blocks, axis=1)            # (rows_pad, 4*HP)

    w_ih = pack_w(w_ih_t, IN)                             # (IN, 4HP)
    w_hh = pack_w(w_hh_t, HP)                             # (HP, 4HP)
    bi, bf, bg, bo = jnp.split(b_t, 4)
    b_lstm = jnp.concatenate(
        [jnp.pad(x, (0, HP - H)) for x in (bi, bf, bo, bg)]).reshape(1, 4 * HP)

    # head: Linear(H+E -> 2E) -> ReLU -> Linear(2E -> V); h-rows padded to HP,
    # output columns padded to VP, padded entries exactly zero.
    s1 = 1.0 / ((H + E) ** 0.5)
    w1_t = u(keys[8], (2 * E, H + E), s1)                 # torch (out, in)
    b1 = u(keys[9], (1, 2 * E), s1)
    w1 = jnp.zeros((HP + E, 2 * E), jnp.float32)
    w1 = w1.at[:H, :].set(w1_t[:, :H].T)
    w1 = w1.at[HP:HP + E, :].set(w1_t[:, H:].T)

    s2 = 1.0 / ((2 * E) ** 0.5)
    w2_t = u(keys[10], (V, 2 * E), s2)                    # torch (out, in)
    b2_t = u(keys[11], (V,), s2)
    w2 = jnp.zeros((2 * E, VP), jnp.float32).at[:, :V].set(w2_t.T)
    b2 = jnp.zeros((1, VP), jnp.float32).at[0, :V].set(b2_t)

    return dict(cat_emb=cat_emb, amount_emb=amount_emb, id_emb=id_emb,
                dt_emb=dt_emb, w_ih=w_ih, w_hh=w_hh, b_lstm=b_lstm,
                w1=w1, b1=b1, w2=w2, b2=b2)


if __name__ == "__main__":
    # small, module-consistent shapes
    B, look_back, max_cat_len, emb_dim = 2, 8, 5, 8
    cat_vocab_size, id_vocab_size = 12, 10
    amount_vocab_size, dt_vocab_size = 9, 7

    key = jax.random.PRNGKey(0)
    kp, k1, k2, k3, k4 = jax.random.split(key, 5)

    params = init_params(kp, cat_vocab_size, id_vocab_size,
                         amount_vocab_size, dt_vocab_size, emb_dim)

    # indices may include the padding index (== vocab size) for cat/amount
    cat_arr = jax.random.randint(k1, (B, look_back, max_cat_len), 0,
                                 cat_vocab_size + 1, jnp.int32)
    amount_arr = jax.random.randint(k2, (B, look_back, max_cat_len), 0,
                                    amount_vocab_size + 1, jnp.int32)
    dt_arr = jax.random.randint(k3, (B, look_back), 0, dt_vocab_size, jnp.int32)
    id_arr = jax.random.randint(k4, (B, 1), 0, id_vocab_size, jnp.int32)

    fwd = jax.jit(functools.partial(lstmnet_forward,
                                    cat_vocab_size=cat_vocab_size))
    out = jax.block_until_ready(fwd(params, cat_arr, dt_arr, amount_arr, id_arr))

    assert out.shape == (B, cat_vocab_size), out.shape
    assert jnp.all(jnp.isfinite(out))
    print("KERNEL_OK")
</pallas_src>

<mosaic_0001>
module attributes {stable_mosaic.version = 11 : i64} {
  func.func @lstmnet_kernel(%arg0: i32, %arg1: memref<16x5xi32, #tpu.memory_space<vmem>>, %arg2: memref<16x5xi32, #tpu.memory_space<vmem>>, %arg3: memref<16x1xi32, #tpu.memory_space<vmem>>, %arg4: memref<2x1xi32, #tpu.memory_space<vmem>>, %arg5: memref<13x8xf32, #tpu.memory_space<vmem>>, %arg6: memref<10x8xf32, #tpu.memory_space<vmem>>, %arg7: memref<7x8xf32, #tpu.memory_space<vmem>>, %arg8: memref<10x8xf32, #tpu.memory_space<vmem>>, %arg9: memref<24x128xf32, #tpu.memory_space<vmem>>, %arg10: memref<32x128xf32, #tpu.memory_space<vmem>>, %arg11: memref<1x128xf32, #tpu.memory_space<vmem>>, %arg12: memref<40x16xf32, #tpu.memory_space<vmem>>, %arg13: memref<1x16xf32, #tpu.memory_space<vmem>>, %arg14: memref<16x128xf32, #tpu.memory_space<vmem>>, %arg15: memref<1x128xf32, #tpu.memory_space<vmem>>, %arg16: memref<2x128xf32, #tpu.memory_space<vmem>>) attributes {dimension_semantics = [#tpu.dimension_semantics<arbitrary>], iteration_bounds = array<i64: 1>, scalar_prefetch = 0 : i64, scratch_operands = 0 : i64, tpu.core_type = #tpu.core_type<tc>, window_params = [{pipeline_mode = #tpu.pipeline_mode<synchronous>, transform_indices = @transform_0, window_bounds = array<i64: 16, 5>}, {pipeline_mode = #tpu.pipeline_mode<synchronous>, transform_indices = @transform_1, window_bounds = array<i64: 16, 5>}, {pipeline_mode = #tpu.pipeline_mode<synchronous>, transform_indices = @transform_2, window_bounds = array<i64: 16, 1>}, {pipeline_mode = #tpu.pipeline_mode<synchronous>, transform_indices = @transform_3, window_bounds = array<i64: 2, 1>}, {pipeline_mode = #tpu.pipeline_mode<synchronous>, transform_indices = @transform_4, window_bounds = array<i64: 13, 8>}, {pipeline_mode = #tpu.pipeline_mode<synchronous>, transform_indices = @transform_5, window_bounds = array<i64: 10, 8>}, {pipeline_mode = #tpu.pipeline_mode<synchronous>, transform_indices = @transform_6, window_bounds = array<i64: 7, 8>}, {pipeline_mode = #tpu.pipeline_mode<synchronous>, transform_indices = @transform_7, window_bounds = array<i64: 10, 8>}, {pipeline_mode = #tpu.pipeline_mode<synchronous>, transform_indices = @transform_8, window_bounds = array<i64: 24, 128>}, {pipeline_mode = #tpu.pipeline_mode<synchronous>, transform_indices = @transform_9, window_bounds = array<i64: 32, 128>}, {pipeline_mode = #tpu.pipeline_mode<synchronous>, transform_indices = @transform_10, window_bounds = array<i64: 1, 128>}, {pipeline_mode = #tpu.pipeline_mode<synchronous>, transform_indices = @transform_11, window_bounds = array<i64: 40, 16>}, {pipeline_mode = #tpu.pipeline_mode<synchronous>, transform_indices = @transform_12, window_bounds = array<i64: 1, 16>}, {pipeline_mode = #tpu.pipeline_mode<synchronous>, transform_indices = @transform_13, window_bounds = array<i64: 16, 128>}, {pipeline_mode = #tpu.pipeline_mode<synchronous>, transform_indices = @transform_14, window_bounds = array<i64: 1, 128>}, {pipeline_mode = #tpu.pipeline_mode<synchronous>, transform_indices = @transform_15, window_bounds = array<i64: 2, 128>}]} {
    %c0 = arith.constant 0 : index
    %c0_0 = arith.constant 0 : index
    %0 = vector.load %arg1[%c0, %c0_0] : memref<16x5xi32, #tpu.memory_space<vmem>>, vector<16x5xi32>
    %c0_1 = arith.constant 0 : index
    %c0_2 = arith.constant 0 : index
    %1 = vector.load %arg2[%c0_1, %c0_2] : memref<16x5xi32, #tpu.memory_space<vmem>>, vector<16x5xi32>
    %c12_i32 = arith.constant 12 : i32
    %2 = vector.broadcast %c12_i32 : i32 to vector<16x5xi32>
    %3 = arith.cmpi ne, %0, %2 : vector<16x5xi32>
    %4 = arith.extui %3 : vector<16x5xi1> to vector<16x5xi32>
    %5 = arith.sitofp %4 : vector<16x5xi32> to vector<16x5xf32>
    %6 = vector.shape_cast %5 : vector<16x5xf32> to vector<16x5x1xf32>
    %7 = tpu.iota {dimensions = array<i32: 2>} : vector<16x5x13xi32>
    %8 = vector.shape_cast %0 : vector<16x5xi32> to vector<16x5x1xi32>
    %9 = vector.broadcast %8 : vector<16x5x1xi32> to vector<16x5x13xi32>
    %10 = arith.cmpi eq, %9, %7 : vector<16x5x13xi32>
    %11 = arith.extui %10 : vector<16x5x13xi1> to vector<16x5x13xi32>
    %12 = arith.sitofp %11 : vector<16x5x13xi32> to vector<16x5x13xf32>
    %13 = vector.broadcast %6 : vector<16x5x1xf32> to vector<16x5x13xf32>
    %14 = arith.mulf %12, %13 : vector<16x5x13xf32>
    %cst = arith.constant dense<0.000000e+00> : vector<16x13xf32>
    %15 = vector.multi_reduction <add>, %14, %cst [1] : vector<16x5x13xf32> to vector<16x13xf32>
    %16 = tpu.iota {dimensions = array<i32: 2>} : vector<16x5x10xi32>
    %17 = vector.shape_cast %1 : vector<16x5xi32> to vector<16x5x1xi32>
    %18 = vector.broadcast %17 : vector<16x5x1xi32> to vector<16x5x10xi32>
    %19 = arith.cmpi eq, %18, %16 : vector<16x5x10xi32>
    %20 = arith.extui %19 : vector<16x5x10xi1> to vector<16x5x10xi32>
    %21 = arith.sitofp %20 : vector<16x5x10xi32> to vector<16x5x10xf32>
    %22 = vector.broadcast %6 : vector<16x5x1xf32> to vector<16x5x10xf32>
    %23 = arith.mulf %21, %22 : vector<16x5x10xf32>
    %cst_3 = arith.constant dense<0.000000e+00> : vector<16x10xf32>
    %24 = vector.multi_reduction <add>, %23, %cst_3 [1] : vector<16x5x10xf32> to vector<16x10xf32>
    %c0_4 = arith.constant 0 : index
    %c0_5 = arith.constant 0 : index
    %25 = vector.load %arg5[%c0_4, %c0_5] : memref<13x8xf32, #tpu.memory_space<vmem>>, vector<13x8xf32>
    %cst_6 = arith.constant dense<0.000000e+00> : vector<16x8xf32>
    %26 = tpu.matmul %15, %25, %cst_6 {dimension_numbers = #tpu.dot_dimension_numbers<[1], [0], [0], [1], [0, 0, 1, 1], [], []>} : vector<16x13xf32>, vector<13x8xf32>, vector<16x8xf32> -> vector<16x8xf32>
    %c0_7 = arith.constant 0 : index
    %c0_8 = arith.constant 0 : index
    %27 = vector.load %arg6[%c0_7, %c0_8] : memref<10x8xf32, #tpu.memory_space<vmem>>, vector<10x8xf32>
    %cst_9 = arith.constant dense<0.000000e+00> : vector<16x8xf32>
    %28 = tpu.matmul %24, %27, %cst_9 {dimension_numbers = #tpu.dot_dimension_numbers<[1], [0], [0], [1], [0, 0, 1, 1], [], []>} : vector<16x10xf32>, vector<10x8xf32>, vector<16x8xf32> -> vector<16x8xf32>
    %29 = tpu.iota {dimensions = array<i32: 1>} : vector<16x7xi32>
    %c0_10 = arith.constant 0 : index
    %c0_11 = arith.constant 0 : index
    %30 = vector.load %arg3[%c0_10, %c0_11] : memref<16x1xi32, #tpu.memory_space<vmem>>, vector<16x1xi32>
    %31 = vector.broadcast %30 : vector<16x1xi32> to vector<16x7xi32>
    %32 = arith.cmpi eq, %31, %29 : vector<16x7xi32>
    %33 = arith.extui %32 : vector<16x7xi1> to vector<16x7xi32>
    %34 = arith.sitofp %33 : vector<16x7xi32> to vector<16x7xf32>
    %c0_12 = arith.constant 0 : index
    %c0_13 = arith.constant 0 : index
    %35 = vector.load %arg7[%c0_12, %c0_13] : memref<7x8xf32, #tpu.memory_space<vmem>>, vector<7x8xf32>
    %cst_14 = arith.constant dense<0.000000e+00> : vector<16x8xf32>
    %36 = tpu.matmul %34, %35, %cst_14 {dimension_numbers = #tpu.dot_dimension_numbers<[1], [0], [0], [1], [0, 0, 1, 1], [], []>} : vector<16x7xf32>, vector<7x8xf32>, vector<16x8xf32> -> vector<16x8xf32>
    %37 = tpu.iota {dimensions = array<i32: 1>} : vector<2x10xi32>
    %c0_15 = arith.constant 0 : index
    %c0_16 = arith.constant 0 : index
    %38 = vector.load %arg4[%c0_15, %c0_16] : memref<2x1xi32, #tpu.memory_space<vmem>>, vector<2x1xi32>
    %39 = vector.broadcast %38 : vector<2x1xi32> to vector<2x10xi32>
    %40 = arith.cmpi eq, %39, %37 : vector<2x10xi32>
    %41 = arith.extui %40 : vector<2x10xi1> to vector<2x10xi32>
    %42 = arith.sitofp %41 : vector<2x10xi32> to vector<2x10xf32>
    %c0_17 = arith.constant 0 : index
    %c0_18 = arith.constant 0 : index
    %43 = vector.load %arg8[%c0_17, %c0_18] : memref<10x8xf32, #tpu.memory_space<vmem>>, vector<10x8xf32>
    %cst_19 = arith.constant dense<0.000000e+00> : vector<2x8xf32>
    %44 = tpu.matmul %42, %43, %cst_19 {dimension_numbers = #tpu.dot_dimension_numbers<[1], [0], [0], [1], [0, 0, 1, 1], [], []>} : vector<2x10xf32>, vector<10x8xf32>, vector<2x8xf32> -> vector<2x8xf32>
    %45 = tpu.concatenate %26, %28, %36 in 1 : vector<16x8xf32>, vector<16x8xf32>, vector<16x8xf32> -> vector<16x24xf32>
    %c0_20 = arith.constant 0 : index
    %c0_21 = arith.constant 0 : index
    %46 = vector.load %arg9[%c0_20, %c0_21] : memref<24x128xf32, #tpu.memory_space<vmem>>, vector<24x128xf32>
    %cst_22 = arith.constant dense<0.000000e+00> : vector<16x128xf32>
    %47 = tpu.matmul %45, %46, %cst_22 {dimension_numbers = #tpu.dot_dimension_numbers<[1], [0], [0], [1], [0, 0, 1, 1], [], []>} : vector<16x24xf32>, vector<24x128xf32>, vector<16x128xf32> -> vector<16x128xf32>
    %c0_23 = arith.constant 0 : index
    %c0_24 = arith.constant 0 : index
    %48 = vector.load %arg11[%c0_23, %c0_24] : memref<1x128xf32, #tpu.memory_space<vmem>>, vector<1x128xf32>
    %49 = vector.broadcast %48 : vector<1x128xf32> to vector<16x128xf32>
    %50 = arith.addf %47, %49 : vector<16x128xf32>
    %c0_25 = arith.constant 0 : index
    %c0_26 = arith.constant 0 : index
    %51 = vector.load %arg10[%c0_25, %c0_26] : memref<32x128xf32, #tpu.memory_space<vmem>>, vector<32x128xf32>
    %cst_27 = arith.constant 0.000000e+00 : f32
    %52 = vector.broadcast %cst_27 : f32 to vector<2x32xf32>
    %cst_28 = arith.constant 0.000000e+00 : f32
    %53 = vector.broadcast %cst_28 : f32 to vector<2x32xf32>
    %54 = vector.extract_strided_slice %50 {offsets = [0, 0], sizes = [2, 128], strides = [1, 1]} : vector<16x128xf32> to vector<2x128xf32>
    %cst_29 = arith.constant dense<0.000000e+00> : vector<2x128xf32>
    %55 = tpu.matmul %52, %51, %cst_29 {dimension_numbers = #tpu.dot_dimension_numbers<[1], [0], [0], [1], [0, 0, 1, 1], [], []>} : vector<2x32xf32>, vector<32x128xf32>, vector<2x128xf32> -> vector<2x128xf32>
    %56 = arith.addf %54, %55 : vector<2x128xf32>
    %57 = vector.extract_strided_slice %56 {offsets = [0, 0], sizes = [2, 96], strides = [1, 1]} : vector<2x128xf32> to vector<2x96xf32>
    %58 = arith.negf %57 : vector<2x96xf32>
    %59 = math.exp %58 : vector<2x96xf32>
    %cst_30 = arith.constant 1.000000e+00 : f32
    %60 = vector.broadcast %cst_30 : f32 to vector<2x96xf32>
    %61 = arith.addf %60, %59 : vector<2x96xf32>
    %62 = arith.divf %60, %61 : vector<2x96xf32>
    %63 = vector.extract_strided_slice %56 {offsets = [0, 96], sizes = [2, 32], strides = [1, 1]} : vector<2x128xf32> to vector<2x32xf32>
    %64 = math.tanh %63 : vector<2x32xf32>
    %65 = vector.extract_strided_slice %62 {offsets = [0, 0], sizes = [2, 32], strides = [1, 1]} : vector<2x96xf32> to vector<2x32xf32>
    %66 = vector.extract_strided_slice %62 {offsets = [0, 32], sizes = [2, 32], strides = [1, 1]} : vector<2x96xf32> to vector<2x32xf32>
    %67 = vector.extract_strided_slice %62 {offsets = [0, 64], sizes = [2, 32], strides = [1, 1]} : vector<2x96xf32> to vector<2x32xf32>
    %68 = arith.mulf %66, %53 : vector<2x32xf32>
    %69 = arith.mulf %65, %64 : vector<2x32xf32>
    %70 = arith.addf %68, %69 : vector<2x32xf32>
    %71 = math.tanh %70 : vector<2x32xf32>
    %72 = arith.mulf %67, %71 : vector<2x32xf32>
    %73 = vector.extract_strided_slice %50 {offsets = [2, 0], sizes = [2, 128], strides = [1, 1]} : vector<16x128xf32> to vector<2x128xf32>
    %cst_31 = arith.constant dense<0.000000e+00> : vector<2x128xf32>
    %74 = tpu.matmul %72, %51, %cst_31 {dimension_numbers = #tpu.dot_dimension_numbers<[1], [0], [0], [1], [0, 0, 1, 1], [], []>} : vector<2x32xf32>, vector<32x128xf32>, vector<2x128xf32> -> vector<2x128xf32>
    %75 = arith.addf %73, %74 : vector<2x128xf32>
    %76 = vector.extract_strided_slice %75 {offsets = [0, 0], sizes = [2, 96], strides = [1, 1]} : vector<2x128xf32> to vector<2x96xf32>
    %77 = arith.negf %76 : vector<2x96xf32>
    %78 = math.exp %77 : vector<2x96xf32>
    %cst_32 = arith.constant 1.000000e+00 : f32
    %79 = vector.broadcast %cst_32 : f32 to vector<2x96xf32>
    %80 = arith.addf %79, %78 : vector<2x96xf32>
    %81 = arith.divf %79, %80 : vector<2x96xf32>
    %82 = vector.extract_strided_slice %75 {offsets = [0, 96], sizes = [2, 32], strides = [1, 1]} : vector<2x128xf32> to vector<2x32xf32>
    %83 = math.tanh %82 : vector<2x32xf32>
    %84 = vector.extract_strided_slice %81 {offsets = [0, 0], sizes = [2, 32], strides = [1, 1]} : vector<2x96xf32> to vector<2x32xf32>
    %85 = vector.extract_strided_slice %81 {offsets = [0, 32], sizes = [2, 32], strides = [1, 1]} : vector<2x96xf32> to vector<2x32xf32>
    %86 = vector.extract_strided_slice %81 {offsets = [0, 64], sizes = [2, 32], strides = [1, 1]} : vector<2x96xf32> to vector<2x32xf32>
    %87 = arith.mulf %85, %70 : vector<2x32xf32>
    %88 = arith.mulf %84, %83 : vector<2x32xf32>
    %89 = arith.addf %87, %88 : vector<2x32xf32>
    %90 = math.tanh %89 : vector<2x32xf32>
    %91 = arith.mulf %86, %90 : vector<2x32xf32>
    %92 = vector.extract_strided_slice %50 {offsets = [4, 0], sizes = [2, 128], strides = [1, 1]} : vector<16x128xf32> to vector<2x128xf32>
    %cst_33 = arith.constant dense<0.000000e+00> : vector<2x128xf32>
    %93 = tpu.matmul %91, %51, %cst_33 {dimension_numbers = #tpu.dot_dimension_numbers<[1], [0], [0], [1], [0, 0, 1, 1], [], []>} : vector<2x32xf32>, vector<32x128xf32>, vector<2x128xf32> -> vector<2x128xf32>
    %94 = arith.addf %92, %93 : vector<2x128xf32>
    %95 = vector.extract_strided_slice %94 {offsets = [0, 0], sizes = [2, 96], strides = [1, 1]} : vector<2x128xf32> to vector<2x96xf32>
    %96 = arith.negf %95 : vector<2x96xf32>
    %97 = math.exp %96 : vector<2x96xf32>
    %cst_34 = arith.constant 1.000000e+00 : f32
    %98 = vector.broadcast %cst_34 : f32 to vector<2x96xf32>
    %99 = arith.addf %98, %97 : vector<2x96xf32>
    %100 = arith.divf %98, %99 : vector<2x96xf32>
    %101 = vector.extract_strided_slice %94 {offsets = [0, 96], sizes = [2, 32], strides = [1, 1]} : vector<2x128xf32> to vector<2x32xf32>
    %102 = math.tanh %101 : vector<2x32xf32>
    %103 = vector.extract_strided_slice %100 {offsets = [0, 0], sizes = [2, 32], strides = [1, 1]} : vector<2x96xf32> to vector<2x32xf32>
    %104 = vector.extract_strided_slice %100 {offsets = [0, 32], sizes = [2, 32], strides = [1, 1]} : vector<2x96xf32> to vector<2x32xf32>
    %105 = vector.extract_strided_slice %100 {offsets = [0, 64], sizes = [2, 32], strides = [1, 1]} : vector<2x96xf32> to vector<2x32xf32>
    %106 = arith.mulf %104, %89 : vector<2x32xf32>
    %107 = arith.mulf %103, %102 : vector<2x32xf32>
    %108 = arith.addf %106, %107 : vector<2x32xf32>
    %109 = math.tanh %108 : vector<2x32xf32>
    %110 = arith.mulf %105, %109 : vector<2x32xf32>
    %111 = vector.extract_strided_slice %50 {offsets = [6, 0], sizes = [2, 128], strides = [1, 1]} : vector<16x128xf32> to vector<2x128xf32>
    %cst_35 = arith.constant dense<0.000000e+00> : vector<2x128xf32>
    %112 = tpu.matmul %110, %51, %cst_35 {dimension_numbers = #tpu.dot_dimension_numbers<[1], [0], [0], [1], [0, 0, 1, 1], [], []>} : vector<2x32xf32>, vector<32x128xf32>, vector<2x128xf32> -> vector<2x128xf32>
    %113 = arith.addf %111, %112 : vector<2x128xf32>
    %114 = vector.extract_strided_slice %113 {offsets = [0, 0], sizes = [2, 96], strides = [1, 1]} : vector<2x128xf32> to vector<2x96xf32>
    %115 = arith.negf %114 : vector<2x96xf32>
    %116 = math.exp %115 : vector<2x96xf32>
    %cst_36 = arith.constant 1.000000e+00 : f32
    %117 = vector.broadcast %cst_36 : f32 to vector<2x96xf32>
    %118 = arith.addf %117, %116 : vector<2x96xf32>
    %119 = arith.divf %117, %118 : vector<2x96xf32>
    %120 = vector.extract_strided_slice %113 {offsets = [0, 96], sizes = [2, 32], strides = [1, 1]} : vector<2x128xf32> to vector<2x32xf32>
    %121 = math.tanh %120 : vector<2x32xf32>
    %122 = vector.extract_strided_slice %119 {offsets = [0, 0], sizes = [2, 32], strides = [1, 1]} : vector<2x96xf32> to vector<2x32xf32>
    %123 = vector.extract_strided_slice %119 {offsets = [0, 32], sizes = [2, 32], strides = [1, 1]} : vector<2x96xf32> to vector<2x32xf32>
    %124 = vector.extract_strided_slice %119 {offsets = [0, 64], sizes = [2, 32], strides = [1, 1]} : vector<2x96xf32> to vector<2x32xf32>
    %125 = arith.mulf %123, %108 : vector<2x32xf32>
    %126 = arith.mulf %122, %121 : vector<2x32xf32>
    %127 = arith.addf %125, %126 : vector<2x32xf32>
    %128 = math.tanh %127 : vector<2x32xf32>
    %129 = arith.mulf %124, %128 : vector<2x32xf32>
    %130 = vector.extract_strided_slice %50 {offsets = [8, 0], sizes = [2, 128], strides = [1, 1]} : vector<16x128xf32> to vector<2x128xf32>
    %cst_37 = arith.constant dense<0.000000e+00> : vector<2x128xf32>
    %131 = tpu.matmul %129, %51, %cst_37 {dimension_numbers = #tpu.dot_dimension_numbers<[1], [0], [0], [1], [0, 0, 1, 1], [], []>} : vector<2x32xf32>, vector<32x128xf32>, vector<2x128xf32> -> vector<2x128xf32>
    %132 = arith.addf %130, %131 : vector<2x128xf32>
    %133 = vector.extract_strided_slice %132 {offsets = [0, 0], sizes = [2, 96], strides = [1, 1]} : vector<2x128xf32> to vector<2x96xf32>
    %134 = arith.negf %133 : vector<2x96xf32>
    %135 = math.exp %134 : vector<2x96xf32>
    %cst_38 = arith.constant 1.000000e+00 : f32
    %136 = vector.broadcast %cst_38 : f32 to vector<2x96xf32>
    %137 = arith.addf %136, %135 : vector<2x96xf32>
    %138 = arith.divf %136, %137 : vector<2x96xf32>
    %139 = vector.extract_strided_slice %132 {offsets = [0, 96], sizes = [2, 32], strides = [1, 1]} : vector<2x128xf32> to vector<2x32xf32>
    %140 = math.tanh %139 : vector<2x32xf32>
    %141 = vector.extract_strided_slice %138 {offsets = [0, 0], sizes = [2, 32], strides = [1, 1]} : vector<2x96xf32> to vector<2x32xf32>
    %142 = vector.extract_strided_slice %138 {offsets = [0, 32], sizes = [2, 32], strides = [1, 1]} : vector<2x96xf32> to vector<2x32xf32>
    %143 = vector.extract_strided_slice %138 {offsets = [0, 64], sizes = [2, 32], strides = [1, 1]} : vector<2x96xf32> to vector<2x32xf32>
    %144 = arith.mulf %142, %127 : vector<2x32xf32>
    %145 = arith.mulf %141, %140 : vector<2x32xf32>
    %146 = arith.addf %144, %145 : vector<2x32xf32>
    %147 = math.tanh %146 : vector<2x32xf32>
    %148 = arith.mulf %143, %147 : vector<2x32xf32>
    %149 = vector.extract_strided_slice %50 {offsets = [10, 0], sizes = [2, 128], strides = [1, 1]} : vector<16x128xf32> to vector<2x128xf32>
    %cst_39 = arith.constant dense<0.000000e+00> : vector<2x128xf32>
    %150 = tpu.matmul %148, %51, %cst_39 {dimension_numbers = #tpu.dot_dimension_numbers<[1], [0], [0], [1], [0, 0, 1, 1], [], []>} : vector<2x32xf32>, vector<32x128xf32>, vector<2x128xf32> -> vector<2x128xf32>
    %151 = arith.addf %149, %150 : vector<2x128xf32>
    %152 = vector.extract_strided_slice %151 {offsets = [0, 0], sizes = [2, 96], strides = [1, 1]} : vector<2x128xf32> to vector<2x96xf32>
    %153 = arith.negf %152 : vector<2x96xf32>
    %154 = math.exp %153 : vector<2x96xf32>
    %cst_40 = arith.constant 1.000000e+00 : f32
    %155 = vector.broadcast %cst_40 : f32 to vector<2x96xf32>
    %156 = arith.addf %155, %154 : vector<2x96xf32>
    %157 = arith.divf %155, %156 : vector<2x96xf32>
    %158 = vector.extract_strided_slice %151 {offsets = [0, 96], sizes = [2, 32], strides = [1, 1]} : vector<2x128xf32> to vector<2x32xf32>
    %159 = math.tanh %158 : vector<2x32xf32>
    %160 = vector.extract_strided_slice %157 {offsets = [0, 0], sizes = [2, 32], strides = [1, 1]} : vector<2x96xf32> to vector<2x32xf32>
    %161 = vector.extract_strided_slice %157 {offsets = [0, 32], sizes = [2, 32], strides = [1, 1]} : vector<2x96xf32> to vector<2x32xf32>
    %162 = vector.extract_strided_slice %157 {offsets = [0, 64], sizes = [2, 32], strides = [1, 1]} : vector<2x96xf32> to vector<2x32xf32>
    %163 = arith.mulf %161, %146 : vector<2x32xf32>
    %164 = arith.mulf %160, %159 : vector<2x32xf32>
    %165 = arith.addf %163, %164 : vector<2x32xf32>
    %166 = math.tanh %165 : vector<2x32xf32>
    %167 = arith.mulf %162, %166 : vector<2x32xf32>
    %168 = vector.extract_strided_slice %50 {offsets = [12, 0], sizes = [2, 128], strides = [1, 1]} : vector<16x128xf32> to vector<2x128xf32>
    %cst_41 = arith.constant dense<0.000000e+00> : vector<2x128xf32>
    %169 = tpu.matmul %167, %51, %cst_41 {dimension_numbers = #tpu.dot_dimension_numbers<[1], [0], [0], [1], [0, 0, 1, 1], [], []>} : vector<2x32xf32>, vector<32x128xf32>, vector<2x128xf32> -> vector<2x128xf32>
    %170 = arith.addf %168, %169 : vector<2x128xf32>
    %171 = vector.extract_strided_slice %170 {offsets = [0, 0], sizes = [2, 96], strides = [1, 1]} : vector<2x128xf32> to vector<2x96xf32>
    %172 = arith.negf %171 : vector<2x96xf32>
    %173 = math.exp %172 : vector<2x96xf32>
    %cst_42 = arith.constant 1.000000e+00 : f32
    %174 = vector.broadcast %cst_42 : f32 to vector<2x96xf32>
    %175 = arith.addf %174, %173 : vector<2x96xf32>
    %176 = arith.divf %174, %175 : vector<2x96xf32>
    %177 = vector.extract_strided_slice %170 {offsets = [0, 96], sizes = [2, 32], strides = [1, 1]} : vector<2x128xf32> to vector<2x32xf32>
    %178 = math.tanh %177 : vector<2x32xf32>
    %179 = vector.extract_strided_slice %176 {offsets = [0, 0], sizes = [2, 32], strides = [1, 1]} : vector<2x96xf32> to vector<2x32xf32>
    %180 = vector.extract_strided_slice %176 {offsets = [0, 32], sizes = [2, 32], strides = [1, 1]} : vector<2x96xf32> to vector<2x32xf32>
    %181 = vector.extract_strided_slice %176 {offsets = [0, 64], sizes = [2, 32], strides = [1, 1]} : vector<2x96xf32> to vector<2x32xf32>
    %182 = arith.mulf %180, %165 : vector<2x32xf32>
    %183 = arith.mulf %179, %178 : vector<2x32xf32>
    %184 = arith.addf %182, %183 : vector<2x32xf32>
    %185 = math.tanh %184 : vector<2x32xf32>
    %186 = arith.mulf %181, %185 : vector<2x32xf32>
    %187 = vector.extract_strided_slice %50 {offsets = [14, 0], sizes = [2, 128], strides = [1, 1]} : vector<16x128xf32> to vector<2x128xf32>
    %cst_43 = arith.constant dense<0.000000e+00> : vector<2x128xf32>
    %188 = tpu.matmul %186, %51, %cst_43 {dimension_numbers = #tpu.dot_dimension_numbers<[1], [0], [0], [1], [0, 0, 1, 1], [], []>} : vector<2x32xf32>, vector<32x128xf32>, vector<2x128xf32> -> vector<2x128xf32>
    %189 = arith.addf %187, %188 : vector<2x128xf32>
    %190 = vector.extract_strided_slice %189 {offsets = [0, 0], sizes = [2, 96], strides = [1, 1]} : vector<2x128xf32> to vector<2x96xf32>
    %191 = arith.negf %190 : vector<2x96xf32>
    %192 = math.exp %191 : vector<2x96xf32>
    %cst_44 = arith.constant 1.000000e+00 : f32
    %193 = vector.broadcast %cst_44 : f32 to vector<2x96xf32>
    %194 = arith.addf %193, %192 : vector<2x96xf32>
    %195 = arith.divf %193, %194 : vector<2x96xf32>
    %196 = vector.extract_strided_slice %189 {offsets = [0, 96], sizes = [2, 32], strides = [1, 1]} : vector<2x128xf32> to vector<2x32xf32>
    %197 = math.tanh %196 : vector<2x32xf32>
    %198 = vector.extract_strided_slice %195 {offsets = [0, 0], sizes = [2, 32], strides = [1, 1]} : vector<2x96xf32> to vector<2x32xf32>
    %199 = vector.extract_strided_slice %195 {offsets = [0, 32], sizes = [2, 32], strides = [1, 1]} : vector<2x96xf32> to vector<2x32xf32>
    %200 = vector.extract_strided_slice %195 {offsets = [0, 64], sizes = [2, 32], strides = [1, 1]} : vector<2x96xf32> to vector<2x32xf32>
    %201 = arith.mulf %199, %184 : vector<2x32xf32>
    %202 = arith.mulf %198, %197 : vector<2x32xf32>
    %203 = arith.addf %201, %202 : vector<2x32xf32>
    %204 = math.tanh %203 : vector<2x32xf32>
    %205 = arith.mulf %200, %204 : vector<2x32xf32>
    %206 = tpu.concatenate %205, %44 in 1 : vector<2x32xf32>, vector<2x8xf32> -> vector<2x40xf32>
    %c0_45 = arith.constant 0 : index
    %c0_46 = arith.constant 0 : index
    %207 = vector.load %arg12[%c0_45, %c0_46] : memref<40x16xf32, #tpu.memory_space<vmem>>, vector<40x16xf32>
    %cst_47 = arith.constant dense<0.000000e+00> : vector<2x16xf32>
    %208 = tpu.matmul %206, %207, %cst_47 {dimension_numbers = #tpu.dot_dimension_numbers<[1], [0], [0], [1], [0, 0, 1, 1], [], []>} : vector<2x40xf32>, vector<40x16xf32>, vector<2x16xf32> -> vector<2x16xf32>
    %c0_48 = arith.constant 0 : index
    %c0_49 = arith.constant 0 : index
    %209 = vector.load %arg13[%c0_48, %c0_49] : memref<1x16xf32, #tpu.memory_space<vmem>>, vector<1x16xf32>
    %210 = vector.broadcast %209 : vector<1x16xf32> to vector<2x16xf32>
    %211 = arith.addf %208, %210 : vector<2x16xf32>
    %cst_50 = arith.constant 0.000000e+00 : f32
    %212 = vector.broadcast %cst_50 : f32 to vector<2x16xf32>
    %213 = arith.maximumf %211, %212 : vector<2x16xf32>
    %c0_51 = arith.constant 0 : index
    %c0_52 = arith.constant 0 : index
    %214 = vector.load %arg14[%c0_51, %c0_52] : memref<16x128xf32, #tpu.memory_space<vmem>>, vector<16x128xf32>
    %cst_53 = arith.constant dense<0.000000e+00> : vector<2x128xf32>
    %215 = tpu.matmul %213, %214, %cst_53 {dimension_numbers = #tpu.dot_dimension_numbers<[1], [0], [0], [1], [0, 0, 1, 1], [], []>} : vector<2x16xf32>, vector<16x128xf32>, vector<2x128xf32> -> vector<2x128xf32>
    %c0_54 = arith.constant 0 : index
    %c0_55 = arith.constant 0 : index
    %216 = vector.load %arg15[%c0_54, %c0_55] : memref<1x128xf32, #tpu.memory_space<vmem>>, vector<1x128xf32>
    %217 = vector.broadcast %216 : vector<1x128xf32> to vector<2x128xf32>
    %218 = arith.addf %215, %217 : vector<2x128xf32>
    %c0_56 = arith.constant 0 : index
    %c0_57 = arith.constant 0 : index
    %219 = vector.load %arg16[%c0_56, %c0_57] : memref<2x128xf32, #tpu.memory_space<vmem>>, vector<2x128xf32>
    tpu.vector_store %arg16[%c0_56, %c0_57], %218 {strides = array<i32>} : memref<2x128xf32, #tpu.memory_space<vmem>>, vector<2x128xf32>,
    return
  }
  func.func @transform_0(%arg0: i32) -> (i32, i32) {
    %c0_i32 = arith.constant 0 : i32
    %c0_i32_0 = arith.constant 0 : i32
    %c0_i32_1 = arith.constant 0 : i32
    return %c0_i32, %c0_i32_0 : i32, i32
  }
  func.func @transform_1(%arg0: i32) -> (i32, i32) {
    %c0_i32 = arith.constant 0 : i32
    %c0_i32_0 = arith.constant 0 : i32
    %c0_i32_1 = arith.constant 0 : i32
    return %c0_i32, %c0_i32_0 : i32, i32
  }
  func.func @transform_2(%arg0: i32) -> (i32, i32) {
    %c0_i32 = arith.constant 0 : i32
    %c0_i32_0 = arith.constant 0 : i32
    %c0_i32_1 = arith.constant 0 : i32
    return %c0_i32, %c0_i32_0 : i32, i32
  }
  func.func @transform_3(%arg0: i32) -> (i32, i32) {
    %c0_i32 = arith.constant 0 : i32
    %c0_i32_0 = arith.constant 0 : i32
    %c0_i32_1 = arith.constant 0 : i32
    return %c0_i32, %c0_i32_0 : i32, i32
  }
  func.func @transform_4(%arg0: i32) -> (i32, i32) {
    %c0_i32 = arith.constant 0 : i32
    %c0_i32_0 = arith.constant 0 : i32
    %c0_i32_1 = arith.constant 0 : i32
    return %c0_i32, %c0_i32_0 : i32, i32
  }
  func.func @transform_5(%arg0: i32) -> (i32, i32) {
    %c0_i32 = arith.constant 0 : i32
    %c0_i32_0 = arith.constant 0 : i32
    %c0_i32_1 = arith.constant 0 : i32
    return %c0_i32, %c0_i32_0 : i32, i32
  }
  func.func @transform_6(%arg0: i32) -> (i32, i32) {
    %c0_i32 = arith.constant 0 : i32
    %c0_i32_0 = arith.constant 0 : i32
    %c0_i32_1 = arith.constant 0 : i32
    return %c0_i32, %c0_i32_0 : i32, i32
  }
  func.func @transform_7(%arg0: i32) -> (i32, i32) {
    %c0_i32 = arith.constant 0 : i32
    %c0_i32_0 = arith.constant 0 : i32
    %c0_i32_1 = arith.constant 0 : i32
    return %c0_i32, %c0_i32_0 : i32, i32
  }
  func.func @transform_8(%arg0: i32) -> (i32, i32) {
    %c0_i32 = arith.constant 0 : i32
    %c0_i32_0 = arith.constant 0 : i32
    %c0_i32_1 = arith.constant 0 : i32
    return %c0_i32, %c0_i32_0 : i32, i32
  }
  func.func @transform_9(%arg0: i32) -> (i32, i32) {
    %c0_i32 = arith.constant 0 : i32
    %c0_i32_0 = arith.constant 0 : i32
    %c0_i32_1 = arith.constant 0 : i32
    return %c0_i32, %c0_i32_0 : i32, i32
  }
  func.func @transform_10(%arg0: i32) -> (i32, i32) {
    %c0_i32 = arith.constant 0 : i32
    %c0_i32_0 = arith.constant 0 : i32
    %c0_i32_1 = arith.constant 0 : i32
    return %c0_i32, %c0_i32_0 : i32, i32
  }
  func.func @transform_11(%arg0: i32) -> (i32, i32) {
    %c0_i32 = arith.constant 0 : i32
    %c0_i32_0 = arith.constant 0 : i32
    %c0_i32_1 = arith.constant 0 : i32
    return %c0_i32, %c0_i32_0 : i32, i32
  }
  func.func @transform_12(%arg0: i32) -> (i32, i32) {
    %c0_i32 = arith.constant 0 : i32
    %c0_i32_0 = arith.constant 0 : i32
    %c0_i32_1 = arith.constant 0 : i32
    return %c0_i32, %c0_i32_0 : i32, i32
  }
  func.func @transform_13(%arg0: i32) -> (i32, i32) {
    %c0_i32 = arith.constant 0 : i32
    %c0_i32_0 = arith.constant 0 : i32
    %c0_i32_1 = arith.constant 0 : i32
    return %c0_i32, %c0_i32_0 : i32, i32
  }
  func.func @transform_14(%arg0: i32) -> (i32, i32) {
    %c0_i32 = arith.constant 0 : i32
    %c0_i32_0 = arith.constant 0 : i32
    %c0_i32_1 = arith.constant 0 : i32
    return %c0_i32, %c0_i32_0 : i32, i32
  }
  func.func @transform_15(%arg0: i32) -> (i32, i32) {
    %c0_i32 = arith.constant 0 : i32
    %c0_i32_0 = arith.constant 0 : i32
    %c0_i32_1 = arith.constant 0 : i32
    return %c0_i32, %c0_i32_0 : i32, i32
  }
}

</mosaic_0001>

<llo_original>
// kernel: lstmnet_forward.1
$region0: #{lstmnet_forward.1}
  #allocation0 [shape = 'u32[]', space=smem, size = 0x4, offset = 0x4, fixed_abs, tag = 'smem constant byte address 0x4 - core index']
  #allocation1 [shape = 'u32[144,128]{1,0:T(1,128)}', space=vmem, size = 0x12000, scoped, tag = 'internal scratch']
  %s0 = inlined_call_operand.vmem [shape: s32[16,5], index: 0, kind: input, shape index: {}]
  %s1 = inlined_call_operand.vmem [shape: s32[16,5], index: 1, kind: input, shape index: {}]
  %s2 = inlined_call_operand.vmem [shape: s32[16,1], index: 2, kind: input, shape index: {}]
  %s3 = inlined_call_operand.vmem [shape: s32[2,1], index: 3, kind: input, shape index: {}]
  %s4 = inlined_call_operand.vmem [shape: f32[13,8], index: 4, kind: input, shape index: {}]
  %s5 = inlined_call_operand.vmem [shape: f32[10,8], index: 5, kind: input, shape index: {}]
  %s6 = inlined_call_operand.vmem [shape: f32[7,8], index: 6, kind: input, shape index: {}]
  %s7 = inlined_call_operand.vmem [shape: f32[10,8], index: 7, kind: input, shape index: {}]
  %s8 = inlined_call_operand.vmem [shape: f32[24,128], index: 8, kind: input, shape index: {}]
  %s9 = inlined_call_operand.vmem [shape: f32[32,128], index: 9, kind: input, shape index: {}]
  %s10 = inlined_call_operand.vmem [shape: f32[1,128], index: 10, kind: input, shape index: {}]
  %s11 = inlined_call_operand.vmem [shape: f32[40,16], index: 11, kind: input, shape index: {}]
  %s12 = inlined_call_operand.vmem [shape: f32[1,16], index: 12, kind: input, shape index: {}]
  %s13 = inlined_call_operand.vmem [shape: f32[16,128], index: 13, kind: input, shape index: {}]
  %s14 = inlined_call_operand.vmem [shape: f32[1,128], index: 14, kind: input, shape index: {}]
  %s15 = inlined_call_operand.hbm [shape: f32[2,128], index: 15, kind: output, shape index: {}]
  %s16 = sld [smem:[#allocation0]]
  $region70: #{lstmnet_forward.1} parent=0
    _
  %s18 = ssub.s32 1, %s16
  %s19 = scalar_select 0, %s18, %s16
  $region1: #{lstmnet_forward.1} parent=0
    #allocation2 [shape = 'u8[1024]{0}', space=vmem, size = 0x400, scoped, tag = 'output window, operand 0, single buffered']
    #allocation3 [shape = 's32[1]{0}', space=sflag, size = 0x4, scoped, tag = 'scoped memory for lstmnet_forward.1']
    %20 = vsyncpa [#allocation3], 0
    // Predicated region
    $region2: #{lstmnet_forward.1} parent=1 // pred_check
      _
    $region3: #{lstmnet_forward.1} parent=1 // pred_check_branch
      %22 = sbr.rel (0) target = $region5
    $region4: #{lstmnet_forward.1} parent=1 // pred_region
      _
    $region5: #{lstmnet_forward.1} parent=1 // pred_fallthru
      _
    // Predicated region
    $region6: #{lstmnet_forward.1} parent=1 // pred_check
      _
    $region7: #{lstmnet_forward.1} parent=1 // pred_check_branch
      %24 = sbr.rel (0) target = $region9
    $region8: #{lstmnet_forward.1} parent=1 // pred_region
      _
    $region9: #{lstmnet_forward.1} parent=1 // pred_fallthru
      _
    // Predicated region
    $region10: #{lstmnet_forward.1} parent=1 // pred_check
      _
    $region11: #{lstmnet_forward.1} parent=1 // pred_check_branch
      %26 = sbr.rel (0) target = $region13
    $region12: #{lstmnet_forward.1} parent=1 // pred_region
      _
    $region13: #{lstmnet_forward.1} parent=1 // pred_fallthru
      _
    // Predicated region
    $region14: #{lstmnet_forward.1} parent=1 // pred_check
      _
    $region15: #{lstmnet_forward.1} parent=1 // pred_check_branch
      %28 = sbr.rel (0) target = $region17
    $region16: #{lstmnet_forward.1} parent=1 // pred_region
      _
    $region17: #{lstmnet_forward.1} parent=1 // pred_fallthru
      _
    // Predicated region
    $region18: #{lstmnet_forward.1} parent=1 // pred_check
      _
    $region19: #{lstmnet_forward.1} parent=1 // pred_check_branch
      %30 = sbr.rel (0) target = $region21
    $region20: #{lstmnet_forward.1} parent=1 // pred_region
      _
    $region21: #{lstmnet_forward.1} parent=1 // pred_fallthru
      _
    // Predicated region
    $region22: #{lstmnet_forward.1} parent=1 // pred_check
      _
    $region23: #{lstmnet_forward.1} parent=1 // pred_check_branch
      %32 = sbr.rel (0) target = $region25
    $region24: #{lstmnet_forward.1} parent=1 // pred_region
      _
    $region25: #{lstmnet_forward.1} parent=1 // pred_fallthru
      _
    // Predicated region
    $region26: #{lstmnet_forward.1} parent=1 // pred_check
      _
    $region27: #{lstmnet_forward.1} parent=1 // pred_check_branch
      %34 = sbr.rel (0) target = $region29
    $region28: #{lstmnet_forward.1} parent=1 // pred_region
      _
    $region29: #{lstmnet_forward.1} parent=1 // pred_fallthru
      _
    // Predicated region
    $region30: #{lstmnet_forward.1} parent=1 // pred_check
      _
    $region31: #{lstmnet_forward.1} parent=1 // pred_check_branch
      %36 = sbr.rel (0) target = $region33
    $region32: #{lstmnet_forward.1} parent=1 // pred_region
      _
    $region33: #{lstmnet_forward.1} parent=1 // pred_fallthru
      _
    // Predicated region
    $region34: #{lstmnet_forward.1} parent=1 // pred_check
      _
    $region35: #{lstmnet_forward.1} parent=1 // pred_check_branch
      %38 = sbr.rel (0) target = $region37
    $region36: #{lstmnet_forward.1} parent=1 // pred_region
      _
    $region37: #{lstmnet_forward.1} parent=1 // pred_fallthru
      _
    // Predicated region
    $region38: #{lstmnet_forward.1} parent=1 // pred_check
      _
    $region39: #{lstmnet_forward.1} parent=1 // pred_check_branch
      %40 = sbr.rel (0) target = $region41
    $region40: #{lstmnet_forward.1} parent=1 // pred_region
      _
    $region41: #{lstmnet_forward.1} parent=1 // pred_fallthru
      _
    // Predicated region
    $region42: #{lstmnet_forward.1} parent=1 // pred_check
      _
    $region43: #{lstmnet_forward.1} parent=1 // pred_check_branch
      %42 = sbr.rel (0) target = $region45
    $region44: #{lstmnet_forward.1} parent=1 // pred_region
      _
    $region45: #{lstmnet_forward.1} parent=1 // pred_fallthru
      _
    // Predicated region
    $region46: #{lstmnet_forward.1} parent=1 // pred_check
      _
    $region47: #{lstmnet_forward.1} parent=1 // pred_check_branch
      %44 = sbr.rel (0) target = $region49
    $region48: #{lstmnet_forward.1} parent=1 // pred_region
      _
    $region49: #{lstmnet_forward.1} parent=1 // pred_fallthru
      _
    // Predicated region
    $region50: #{lstmnet_forward.1} parent=1 // pred_check
      _
    $region51: #{lstmnet_forward.1} parent=1 // pred_check_branch
      %46 = sbr.rel (0) target = $region53
    $region52: #{lstmnet_forward.1} parent=1 // pred_region
      _
    $region53: #{lstmnet_forward.1} parent=1 // pred_fallthru
      _
    // Predicated region
    $region54: #{lstmnet_forward.1} parent=1 // pred_check
      _
    $region55: #{lstmnet_forward.1} parent=1 // pred_check_branch
      %48 = sbr.rel (0) target = $region57
    $region56: #{lstmnet_forward.1} parent=1 // pred_region
      _
    $region57: #{lstmnet_forward.1} parent=1 // pred_fallthru
      _
    // Predicated region
    $region58: #{lstmnet_forward.1} parent=1 // pred_check
      _
    $region59: #{lstmnet_forward.1} parent=1 // pred_check_branch
      %50 = sbr.rel (0) target = $region61
    $region60: #{lstmnet_forward.1} parent=1 // pred_region
      _
    $region61: #{lstmnet_forward.1} parent=1 // pred_fallthru
      _
    %v51 = vld [vmem:[%s0] sm:$0xff]
    %v52 = vld [vmem:[%s0 + $0x8] sm:$0xff]
    %v53 = vld [vmem:[%s1] sm:$0xff]
    %v54 = vld [vmem:[%s1 + $0x8] sm:$0xff]
    %vm55 = vcmp.ne.s32.totalorder %v51, 12
    %vm56 = vcmp.ne.s32.totalorder %v52, 12
    %v57 = vsel %vm55, 1, 0
    %v58 = vsel %vm56, 1, 0
    %v59 = vcvt.s32.f32 %v57
    %v60 = vcvt.s32.f32 %v58
    %v61 = vlaneseq
    %v62 = vshrl.u32 %v61, 7
    %v63 = vsub.s32 0, %v62
    %v64 = vrot.slane %v59, %v63
    %66 = vbcast.lane.b32.xlu0 %v64, 256
    %v67 = vpop.permute.xlu0 %66
    %v68 = vlaneseq
    %v69 = vshrl.u32 %v68, 7
    %v70 = vsub.s32 1, %v69
    %v71 = vrot.slane %v59, %v70
    %73 = vbcast.lane.b32.xlu0 %v71, 256
    %v74 = vpop.permute.xlu0 %73
    %v75 = vlaneseq
    %v76 = vshrl.u32 %v75, 7
    %v77 = vsub.s32 2, %v76
    %v78 = vrot.slane %v59, %v77
    %80 = vbcast.lane.b32.xlu0 %v78, 256
    %v81 = vpop.permute.xlu0 %80
    %v82 = vlaneseq
    %v83 = vshrl.u32 %v82, 7
    %v84 = vsub.s32 3, %v83
    %v85 = vrot.slane %v59, %v84
    %87 = vbcast.lane.b32.xlu0 %v85, 256
    %v88 = vpop.permute.xlu0 %87
    %v89 = vlaneseq
    %v90 = vshrl.u32 %v89, 7
    %v91 = vsub.s32 4, %v90
    %v92 = vrot.slane %v59, %v91
    %94 = vbcast.lane.b32.xlu0 %v92, 256
    %v95 = vpop.permute.xlu0 %94
    %v96 = vlaneseq
    %v97 = vshrl.u32 %v96, 7
    %v98 = vsub.s32 5, %v97
    %v99 = vrot.slane %v59, %v98
    %101 = vbcast.lane.b32.xlu0 %v99, 256
    %v102 = vpop.permute.xlu0 %101
    %v103 = vlaneseq
    %v104 = vshrl.u32 %v103, 7
    %v105 = vsub.s32 6, %v104
    %v106 = vrot.slane %v59, %v105
    %108 = vbcast.lane.b32.xlu0 %v106, 256
    %v109 = vpop.permute.xlu0 %108
    %v110 = vlaneseq
    %v111 = vshrl.u32 %v110, 7
    %v112 = vsub.s32 7, %v111
    %v113 = vrot.slane %v59, %v112
    %115 = vbcast.lane.b32.xlu0 %v113, 256
    %v116 = vpop.permute.xlu0 %115
    %v117 = vlaneseq
    %v118 = vshrl.u32 %v117, 7
    %v119 = vsub.s32 0, %v118
    %v120 = vrot.slane %v60, %v119
    %122 = vbcast.lane.b32.xlu0 %v120, 256
    %v123 = vpop.permute.xlu0 %122
    %v124 = vlaneseq
    %v125 = vshrl.u32 %v124, 7
    %v126 = vsub.s32 1, %v125
    %v127 = vrot.slane %v60, %v126
    %129 = vbcast.lane.b32.xlu0 %v127, 256
    %v130 = vpop.permute.xlu0 %129
    %v131 = vlaneseq
    %v132 = vshrl.u32 %v131, 7
    %v133 = vsub.s32 2, %v132
    %v134 = vrot.slane %v60, %v133
    %136 = vbcast.lane.b32.xlu0 %v134, 256
    %v137 = vpop.permute.xlu0 %136
    %v138 = vlaneseq
    %v139 = vshrl.u32 %v138, 7
    %v140 = vsub.s32 3, %v139
    %v141 = vrot.slane %v60, %v140
    %143 = vbcast.lane.b32.xlu0 %v141, 256
    %v144 = vpop.permute.xlu0 %143
    %v145 = vlaneseq
    %v146 = vshrl.u32 %v145, 7
    %v147 = vsub.s32 4, %v146
    %v148 = vrot.slane %v60, %v147
    %150 = vbcast.lane.b32.xlu0 %v148, 256
    %v151 = vpop.permute.xlu0 %150
    %v152 = vlaneseq
    %v153 = vshrl.u32 %v152, 7
    %v154 = vsub.s32 5, %v153
    %v155 = vrot.slane %v60, %v154
    %157 = vbcast.lane.b32.xlu0 %v155, 256
    %v158 = vpop.permute.xlu0 %157
    %v159 = vlaneseq
    %v160 = vshrl.u32 %v159, 7
    %v161 = vsub.s32 6, %v160
    %v162 = vrot.slane %v60, %v161
    %164 = vbcast.lane.b32.xlu0 %v162, 256
    %v165 = vpop.permute.xlu0 %164
    %v166 = vlaneseq
    %v167 = vshrl.u32 %v166, 7
    %v168 = vsub.s32 7, %v167
    %v169 = vrot.slane %v60, %v168
    %171 = vbcast.lane.b32.xlu0 %v169, 256
    %v172 = vpop.permute.xlu0 %171
    %v173 = vlaneseq
    %v174 = vand.u32 %v173, 127
    %v175 = vlaneseq
    %v176 = vshrl.u32 %v175, 7
    %v177 = vsub.s32 0, %v176
    %v178 = vrot.slane %v51, %v177
    %180 = vbcast.lane.b32.xlu0 %v178, 256
    %v181 = vpop.permute.xlu0 %180
    %v182 = vlaneseq
    %v183 = vshrl.u32 %v182, 7
    %v184 = vsub.s32 1, %v183
    %v185 = vrot.slane %v51, %v184
    %187 = vbcast.lane.b32.xlu0 %v185, 256
    %v188 = vpop.permute.xlu0 %187
    %v189 = vlaneseq
    %v190 = vshrl.u32 %v189, 7
    %v191 = vsub.s32 2, %v190
    %v192 = vrot.slane %v51, %v191
    %194 = vbcast.lane.b32.xlu0 %v192, 256
    %v195 = vpop.permute.xlu0 %194
    %v196 = vlaneseq
    %v197 = vshrl.u32 %v196, 7
    %v198 = vsub.s32 3, %v197
    %v199 = vrot.slane %v51, %v198
    %201 = vbcast.lane.b32.xlu0 %v199, 256
    %v202 = vpop.permute.xlu0 %201
    %v203 = vlaneseq
    %v204 = vshrl.u32 %v203, 7
    %v205 = vsub.s32 4, %v204
    %v206 = vrot.slane %v51, %v205
    %208 = vbcast.lane.b32.xlu0 %v206, 256
    %v209 = vpop.permute.xlu0 %208
    %v210 = vlaneseq
    %v211 = vshrl.u32 %v210, 7
    %v212 = vsub.s32 5, %v211
    %v213 = vrot.slane %v51, %v212
    %215 = vbcast.lane.b32.xlu0 %v213, 256
    %v216 = vpop.permute.xlu0 %215
    %v217 = vlaneseq
    %v218 = vshrl.u32 %v217, 7
    %v219 = vsub.s32 6, %v218
    %v220 = vrot.slane %v51, %v219
    %222 = vbcast.lane.b32.xlu0 %v220, 256
    %v223 = vpop.permute.xlu0 %222
    %v224 = vlaneseq
    %v225 = vshrl.u32 %v224, 7
    %v226 = vsub.s32 7, %v225
    %v227 = vrot.slane %v51, %v226
    %229 = vbcast.lane.b32.xlu0 %v227, 256
    %v230 = vpop.permute.xlu0 %229
    %v231 = vlaneseq
    %v232 = vshrl.u32 %v231, 7
    %v233 = vsub.s32 0, %v232
    %v234 = vrot.slane %v52, %v233
    %236 = vbcast.lane.b32.xlu0 %v234, 256
    %v237 = vpop.permute.xlu0 %236
    %v238 = vlaneseq
    %v239 = vshrl.u32 %v238, 7
    %v240 = vsub.s32 1, %v239
    %v241 = vrot.slane %v52, %v240
    %243 = vbcast.lane.b32.xlu0 %v241, 256
    %v244 = vpop.permute.xlu0 %243
    %v245 = vlaneseq
    %v246 = vshrl.u32 %v245, 7
    %v247 = vsub.s32 2, %v246
    %v248 = vrot.slane %v52, %v247
    %250 = vbcast.lane.b32.xlu0 %v248, 256
    %v251 = vpop.permute.xlu0 %250
    %v252 = vlaneseq
    %v253 = vshrl.u32 %v252, 7
    %v254 = vsub.s32 3, %v253
    %v255 = vrot.slane %v52, %v254
    %257 = vbcast.lane.b32.xlu0 %v255, 256
    %v258 = vpop.permute.xlu0 %257
    %v259 = vlaneseq
    %v260 = vshrl.u32 %v259, 7
    %v261 = vsub.s32 4, %v260
    %v262 = vrot.slane %v52, %v261
    %264 = vbcast.lane.b32.xlu0 %v262, 256
    %v265 = vpop.permute.xlu0 %264
    %v266 = vlaneseq
    %v267 = vshrl.u32 %v266, 7
    %v268 = vsub.s32 5, %v267
    %v269 = vrot.slane %v52, %v268
    %271 = vbcast.lane.b32.xlu0 %v269, 256
    %v272 = vpop.permute.xlu0 %271
    %v273 = vlaneseq
    %v274 = vshrl.u32 %v273, 7
    %v275 = vsub.s32 6, %v274
    %v276 = vrot.slane %v52, %v275
    %278 = vbcast.lane.b32.xlu0 %v276, 256
    %v279 = vpop.permute.xlu0 %278
    %v280 = vlaneseq
    %v281 = vshrl.u32 %v280, 7
    %v282 = vsub.s32 7, %v281
    %v283 = vrot.slane %v52, %v282
    %285 = vbcast.lane.b32.xlu0 %v283, 256
    %v286 = vpop.permute.xlu0 %285
    %vm287 = vcmp.eq.s32.totalorder %v181, %v174
    %vm288 = vcmp.eq.s32.totalorder %v188, %v174
    %vm289 = vcmp.eq.s32.totalorder %v195, %v174
    %vm290 = vcmp.eq.s32.totalorder %v202, %v174
    %vm291 = vcmp.eq.s32.totalorder %v209, %v174
    %vm292 = vcmp.eq.s32.totalorder %v216, %v174
    %vm293 = vcmp.eq.s32.totalorder %v223, %v174
    %vm294 = vcmp.eq.s32.totalorder %v230, %v174
    %vm295 = vcmp.eq.s32.totalorder %v237, %v174
    %vm296 = vcmp.eq.s32.totalorder %v244, %v174
    %vm297 = vcmp.eq.s32.totalorder %v251, %v174
    %vm298 = vcmp.eq.s32.totalorder %v258, %v174
    %vm299 = vcmp.eq.s32.totalorder %v265, %v174
    %vm300 = vcmp.eq.s32.totalorder %v272, %v174
    %vm301 = vcmp.eq.s32.totalorder %v279, %v174
    %vm302 = vcmp.eq.s32.totalorder %v286, %v174
    %v303 = vsel %vm287, 1, 0
    %v304 = vsel %vm288, 1, 0
    %v305 = vsel %vm289, 1, 0
    %v306 = vsel %vm290, 1, 0
    %v307 = vsel %vm291, 1, 0
    %v308 = vsel %vm292, 1, 0
    %v309 = vsel %vm293, 1, 0
    %v310 = vsel %vm294, 1, 0
    %v311 = vsel %vm295, 1, 0
    %v312 = vsel %vm296, 1, 0
    %v313 = vsel %vm297, 1, 0
    %v314 = vsel %vm298, 1, 0
    %v315 = vsel %vm299, 1, 0
    %v316 = vsel %vm300, 1, 0
    %v317 = vsel %vm301, 1, 0
    %v318 = vsel %vm302, 1, 0
    %v319 = vcvt.s32.f32 %v303
    %v320 = vcvt.s32.f32 %v304
    %v321 = vcvt.s32.f32 %v305
    %v322 = vcvt.s32.f32 %v306
    %v323 = vcvt.s32.f32 %v307
    %v324 = vcvt.s32.f32 %v308
    %v325 = vcvt.s32.f32 %v309
    %v326 = vcvt.s32.f32 %v310
    %v327 = vcvt.s32.f32 %v311
    %v328 = vcvt.s32.f32 %v312
    %v329 = vcvt.s32.f32 %v313
    %v330 = vcvt.s32.f32 %v314
    %v331 = vcvt.s32.f32 %v315
    %v332 = vcvt.s32.f32 %v316
    %v333 = vcvt.s32.f32 %v317
    %v334 = vcvt.s32.f32 %v318
    %v335 = vmul.f32 %v319, %v67
    %v336 = vmul.f32 %v320, %v74
    %v337 = vmul.f32 %v321, %v81
    %v338 = vmul.f32 %v322, %v88
    %v339 = vmul.f32 %v323, %v95
    %v340 = vmul.f32 %v324, %v102
    %v341 = vmul.f32 %v325, %v109
    %v342 = vmul.f32 %v326, %v116
    %v343 = vmul.f32 %v327, %v123
    %v344 = vmul.f32 %v328, %v130
    %v345 = vmul.f32 %v329, %v137
    %v346 = vmul.f32 %v330, %v144
    %v347 = vmul.f32 %v331, %v151
    %v348 = vmul.f32 %v332, %v158
    %v349 = vmul.f32 %v333, %v165
    %v350 = vmul.f32 %v334, %v172
    %vm351 = vcmask 102400
    %v352 = vsel %vm351, %v335, 0.0
    %v353 = vrot.slane %v352, 4
    %v354 = vadd.f32 %v352, %v353
    %v355 = vrot.slane %v354, 2
    %v356 = vadd.f32 %v354, %v355
    %v357 = vrot.slane %v356, 1
    %v358 = vadd.f32 %v356, %v357
    %v359 = vsel %vm351, %v336, 0.0
    %v360 = vrot.slane %v359, 4
    %v361 = vadd.f32 %v359, %v360
    %v362 = vrot.slane %v361, 2
    %v363 = vadd.f32 %v361, %v362
    %v364 = vrot.slane %v363, 1
    %v365 = vadd.f32 %v363, %v364
    %v366 = vsel %vm351, %v337, 0.0
    %v367 = vrot.slane %v366, 4
    %v368 = vadd.f32 %v366, %v367
    %v369 = vrot.slane %v368, 2
    %v370 = vadd.f32 %v368, %v369
    %v371 = vrot.slane %v370, 1
    %v372 = vadd.f32 %v370, %v371
    %v373 = vsel %vm351, %v338, 0.0
    %v374 = vrot.slane %v373, 4
    %v375 = vadd.f32 %v373, %v374
    %v376 = vrot.slane %v375, 2
    %v377 = vadd.f32 %v375, %v376
    %v378 = vrot.slane %v377, 1
    %v379 = vadd.f32 %v377, %v378
    %v380 = vsel %vm351, %v339, 0.0
    %v381 = vrot.slane %v380, 4
    %v382 = vadd.f32 %v380, %v381
    %v383 = vrot.slane %v382, 2
    %v384 = vadd.f32 %v382, %v383
    %v385 = vrot.slane %v384, 1
    %v386 = vadd.f32 %v384, %v385
    %v387 = vsel %vm351, %v340, 0.0
    %v388 = vrot.slane %v387, 4
    %v389 = vadd.f32 %v387, %v388
    %v390 = vrot.slane %v389, 2
    %v391 = vadd.f32 %v389, %v390
    %v392 = vrot.slane %v391, 1
    %v393 = vadd.f32 %v391, %v392
    %v394 = vsel %vm351, %v341, 0.0
    %v395 = vrot.slane %v394, 4
    %v396 = vadd.f32 %v394, %v395
    %v397 = vrot.slane %v396, 2
    %v398 = vadd.f32 %v396, %v397
    %v399 = vrot.slane %v398, 1
    %v400 = vadd.f32 %v398, %v399
    %v401 = vsel %vm351, %v342, 0.0
    %v402 = vrot.slane %v401, 4
    %v403 = vadd.f32 %v401, %v402
    %v404 = vrot.slane %v403, 2
    %v405 = vadd.f32 %v403, %v404
    %v406 = vrot.slane %v405, 1
    %v407 = vadd.f32 %v405, %v406
    %v408 = vsel %vm351, %v343, 0.0
    %v409 = vrot.slane %v408, 4
    %v410 = vadd.f32 %v408, %v409
    %v411 = vrot.slane %v410, 2
    %v412 = vadd.f32 %v410, %v411
    %v413 = vrot.slane %v412, 1
    %v414 = vadd.f32 %v412, %v413
    %v415 = vsel %vm351, %v344, 0.0
    %v416 = vrot.slane %v415, 4
    %v417 = vadd.f32 %v415, %v416
    %v418 = vrot.slane %v417, 2
    %v419 = vadd.f32 %v417, %v418
    %v420 = vrot.slane %v419, 1
    %v421 = vadd.f32 %v419, %v420
    %v422 = vsel %vm351, %v345, 0.0
    %v423 = vrot.slane %v422, 4
    %v424 = vadd.f32 %v422, %v423
    %v425 = vrot.slane %v424, 2
    %v426 = vadd.f32 %v424, %v425
    %v427 = vrot.slane %v426, 1
    %v428 = vadd.f32 %v426, %v427
    %v429 = vsel %vm351, %v346, 0.0
    %v430 = vrot.slane %v429, 4
    %v431 = vadd.f32 %v429, %v430
    %v432 = vrot.slane %v431, 2
    %v433 = vadd.f32 %v431, %v432
    %v434 = vrot.slane %v433, 1
    %v435 = vadd.f32 %v433, %v434
    %v436 = vsel %vm351, %v347, 0.0
    %v437 = vrot.slane %v436, 4
    %v438 = vadd.f32 %v436, %v437
    %v439 = vrot.slane %v438, 2
    %v440 = vadd.f32 %v438, %v439
    %v441 = vrot.slane %v440, 1
    %v442 = vadd.f32 %v440, %v441
    %v443 = vsel %vm351, %v348, 0.0
    %v444 = vrot.slane %v443, 4
    %v445 = vadd.f32 %v443, %v444
    %v446 = vrot.slane %v445, 2
    %v447 = vadd.f32 %v445, %v446
    %v448 = vrot.slane %v447, 1
    %v449 = vadd.f32 %v447, %v448
    %v450 = vsel %vm351, %v349, 0.0
    %v451 = vrot.slane %v450, 4
    %v452 = vadd.f32 %v450, %v451
    %v453 = vrot.slane %v452, 2
    %v454 = vadd.f32 %v452, %v453
    %v455 = vrot.slane %v454, 1
    %v456 = vadd.f32 %v454, %v455
    %v457 = vsel %vm351, %v350, 0.0
    %v458 = vrot.slane %v457, 4
    %v459 = vadd.f32 %v457, %v458
    %v460 = vrot.slane %v459, 2
    %v461 = vadd.f32 %v459, %v460
    %v462 = vrot.slane %v461, 1
    %v463 = vadd.f32 %v461, %v462
    %v464 = vlaneseq
    %v465 = vshrl.u32 %v464, 7
    %v466 = vsub.s32 0, %v465
    %v467 = vrot.slane %v53, %v466
    %469 = vbcast.lane.b32.xlu0 %v467, 256
    %v470 = vpop.permute.xlu0 %469
    %v471 = vlaneseq
    %v472 = vshrl.u32 %v471, 7
    %v473 = vsub.s32 1, %v472
    %v474 = vrot.slane %v53, %v473
    %476 = vbcast.lane.b32.xlu0 %v474, 256
    %v477 = vpop.permute.xlu0 %476
    %v478 = vlaneseq
    %v479 = vshrl.u32 %v478, 7
    %v480 = vsub.s32 2, %v479
    %v481 = vrot.slane %v53, %v480
    %483 = vbcast.lane.b32.xlu0 %v481, 256
    %v484 = vpop.permute.xlu0 %483
    %v485 = vlaneseq
    %v486 = vshrl.u32 %v485, 7
    %v487 = vsub.s32 3, %v486
    %v488 = vrot.slane %v53, %v487
    %490 = vbcast.lane.b32.xlu0 %v488, 256
    %v491 = vpop.permute.xlu0 %490
    %v492 = vlaneseq
    %v493 = vshrl.u32 %v492, 7
    %v494 = vsub.s32 4, %v493
    %v495 = vrot.slane %v53, %v494
    %497 = vbcast.lane.b32.xlu0 %v495, 256
    %v498 = vpop.permute.xlu0 %497
    %v499 = vlaneseq
    %v500 = vshrl.u32 %v499, 7
    %v501 = vsub.s32 5, %v500
    %v502 = vrot.slane %v53, %v501
    %504 = vbcast.lane.b32.xlu0 %v502, 256
    %v505 = vpop.permute.xlu0 %504
    %v506 = vlaneseq
    %v507 = vshrl.u32 %v506, 7
    %v508 = vsub.s32 6, %v507
    %v509 = vrot.slane %v53, %v508
    %511 = vbcast.lane.b32.xlu0 %v509, 256
    %v512 = vpop.permute.xlu0 %511
    %v513 = vlaneseq
    %v514 = vshrl.u32 %v513, 7
    %v515 = vsub.s32 7, %v514
    %v516 = vrot.slane %v53, %v515
    %518 = vbcast.lane.b32.xlu0 %v516, 256
    %v519 = vpop.permute.xlu0 %518
    %v520 = vlaneseq
    %v521 = vshrl.u32 %v520, 7
    %v522 = vsub.s32 0, %v521
    %v523 = vrot.slane %v54, %v522
    %525 = vbcast.lane.b32.xlu0 %v523, 256
    %v526 = vpop.permute.xlu0 %525
    %v527 = vlaneseq
    %v528 = vshrl.u32 %v527, 7
    %v529 = vsub.s32 1, %v528
    %v530 = vrot.slane %v54, %v529
    %532 = vbcast.lane.b32.xlu0 %v530, 256
    %v533 = vpop.permute.xlu0 %532
    %v534 = vlaneseq
    %v535 = vshrl.u32 %v534, 7
    %v536 = vsub.s32 2, %v535
    %v537 = vrot.slane %v54, %v536
    %539 = vbcast.lane.b32.xlu0 %v537, 256
    %v540 = vpop.permute.xlu0 %539
    %v541 = vlaneseq
    %v542 = vshrl.u32 %v541, 7
    %v543 = vsub.s32 3, %v542
    %v544 = vrot.slane %v54, %v543
    %546 = vbcast.lane.b32.xlu0 %v544, 256
    %v547 = vpop.permute.xlu0 %546
    %v548 = vlaneseq
    %v549 = vshrl.u32 %v548, 7
    %v550 = vsub.s32 4, %v549
    %v551 = vrot.slane %v54, %v550
    %553 = vbcast.lane.b32.xlu0 %v551, 256
    %v554 = vpop.permute.xlu0 %553
    %v555 = vlaneseq
    %v556 = vshrl.u32 %v555, 7
    %v557 = vsub.s32 5, %v556
    %v558 = vrot.slane %v54, %v557
    %560 = vbcast.lane.b32.xlu0 %v558, 256
    %v561 = vpop.permute.xlu0 %560
    %v562 = vlaneseq
    %v563 = vshrl.u32 %v562, 7
    %v564 = vsub.s32 6, %v563
    %v565 = vrot.slane %v54, %v564
    %567 = vbcast.lane.b32.xlu0 %v565, 256
    %v568 = vpop.permute.xlu0 %567
    %v569 = vlaneseq
    %v570 = vshrl.u32 %v569, 7
    %v571 = vsub.s32 7, %v570
    %v572 = vrot.slane %v54, %v571
    %574 = vbcast.lane.b32.xlu0 %v572, 256
    %v575 = vpop.permute.xlu0 %574
    %vm576 = vcmp.eq.s32.totalorder %v470, %v174
    %vm577 = vcmp.eq.s32.totalorder %v477, %v174
    %vm578 = vcmp.eq.s32.totalorder %v484, %v174
    %vm579 = vcmp.eq.s32.totalorder %v491, %v174
    %vm580 = vcmp.eq.s32.totalorder %v498, %v174
    %vm581 = vcmp.eq.s32.totalorder %v505, %v174
    %vm582 = vcmp.eq.s32.totalorder %v512, %v174
    %vm583 = vcmp.eq.s32.totalorder %v519, %v174
    %vm584 = vcmp.eq.s32.totalorder %v526, %v174
    %vm585 = vcmp.eq.s32.totalorder %v533, %v174
    %vm586 = vcmp.eq.s32.totalorder %v540, %v174
    %vm587 = vcmp.eq.s32.totalorder %v547, %v174
    %vm588 = vcmp.eq.s32.totalorder %v554, %v174
    %vm589 = vcmp.eq.s32.totalorder %v561, %v174
    %vm590 = vcmp.eq.s32.totalorder %v568, %v174
    %vm591 = vcmp.eq.s32.totalorder %v575, %v174
    %v592 = vsel %vm576, 1, 0
    %v593 = vsel %vm577, 1, 0
    %v594 = vsel %vm578, 1, 0
    %v595 = vsel %vm579, 1, 0
    %v596 = vsel %vm580, 1, 0
    %v597 = vsel %vm581, 1, 0
    %v598 = vsel %vm582, 1, 0
    %v599 = vsel %vm583, 1, 0
    %v600 = vsel %vm584, 1, 0
    %v601 = vsel %vm585, 1, 0
    %v602 = vsel %vm586, 1, 0
    %v603 = vsel %vm587, 1, 0
    %v604 = vsel %vm588, 1, 0
    %v605 = vsel %vm589, 1, 0
    %v606 = vsel %vm590, 1, 0
    %v607 = vsel %vm591, 1, 0
    %v608 = vcvt.s32.f32 %v592
    %v609 = vcvt.s32.f32 %v593
    %v610 = vcvt.s32.f32 %v594
    %v611 = vcvt.s32.f32 %v595
    %v612 = vcvt.s32.f32 %v596
    %v613 = vcvt.s32.f32 %v597
    %v614 = vcvt.s32.f32 %v598
    %v615 = vcvt.s32.f32 %v599
    %v616 = vcvt.s32.f32 %v600
    %v617 = vcvt.s32.f32 %v601
    %v618 = vcvt.s32.f32 %v602
    %v619 = vcvt.s32.f32 %v603
    %v620 = vcvt.s32.f32 %v604
    %v621 = vcvt.s32.f32 %v605
    %v622 = vcvt.s32.f32 %v606
    %v623 = vcvt.s32.f32 %v607
    %v624 = vmul.f32 %v608, %v67
    %v625 = vmul.f32 %v609, %v74
    %v626 = vmul.f32 %v610, %v81
    %v627 = vmul.f32 %v611, %v88
    %v628 = vmul.f32 %v612, %v95
    %v629 = vmul.f32 %v613, %v102
    %v630 = vmul.f32 %v614, %v109
    %v631 = vmul.f32 %v615, %v116
    %v632 = vmul.f32 %v616, %v123
    %v633 = vmul.f32 %v617, %v130
    %v634 = vmul.f32 %v618, %v137
    %v635 = vmul.f32 %v619, %v144
    %v636 = vmul.f32 %v620, %v151
    %v637 = vmul.f32 %v621, %v158
    %v638 = vmul.f32 %v622, %v165
    %v639 = vmul.f32 %v623, %v172
    %vm640 = vcmask 77824
    %v641 = vsel %vm640, %v624, 0.0
    %v642 = vrot.slane %v641, 4
    %v643 = vadd.f32 %v641, %v642
    %v644 = vrot.slane %v643, 2
    %v645 = vadd.f32 %v643, %v644
    %v646 = vrot.slane %v645, 1
    %v647 = vadd.f32 %v645, %v646
    %v648 = vsel %vm640, %v625, 0.0
    %v649 = vrot.slane %v648, 4
    %v650 = vadd.f32 %v648, %v649
    %v651 = vrot.slane %v650, 2
    %v652 = vadd.f32 %v650, %v651
    %v653 = vrot.slane %v652, 1
    %v654 = vadd.f32 %v652, %v653
    %v655 = vsel %vm640, %v626, 0.0
    %v656 = vrot.slane %v655, 4
    %v657 = vadd.f32 %v655, %v656
    %v658 = vrot.slane %v657, 2
    %v659 = vadd.f32 %v657, %v658
    %v660 = vrot.slane %v659, 1
    %v661 = vadd.f32 %v659, %v660
    %v662 = vsel %vm640, %v627, 0.0
    %v663 = vrot.slane %v662, 4
    %v664 = vadd.f32 %v662, %v663
    %v665 = vrot.slane %v664, 2
    %v666 = vadd.f32 %v664, %v665
    %v667 = vrot.slane %v666, 1
    %v668 = vadd.f32 %v666, %v667
    %v669 = vsel %vm640, %v628, 0.0
    %v670 = vrot.slane %v669, 4
    %v671 = vadd.f32 %v669, %v670
    %v672 = vrot.slane %v671, 2
    %v673 = vadd.f32 %v671, %v672
    %v674 = vrot.slane %v673, 1
    %v675 = vadd.f32 %v673, %v674
    %v676 = vsel %vm640, %v629, 0.0
    %v677 = vrot.slane %v676, 4
    %v678 = vadd.f32 %v676, %v677
    %v679 = vrot.slane %v678, 2
    %v680 = vadd.f32 %v678, %v679
    %v681 = vrot.slane %v680, 1
    %v682 = vadd.f32 %v680, %v681
    %v683 = vsel %vm640, %v630, 0.0
    %v684 = vrot.slane %v683, 4
    %v685 = vadd.f32 %v683, %v684
    %v686 = vrot.slane %v685, 2
    %v687 = vadd.f32 %v685, %v686
    %v688 = vrot.slane %v687, 1
    %v689 = vadd.f32 %v687, %v688
    %v690 = vsel %vm640, %v631, 0.0
    %v691 = vrot.slane %v690, 4
    %v692 = vadd.f32 %v690, %v691
    %v693 = vrot.slane %v692, 2
    %v694 = vadd.f32 %v692, %v693
    %v695 = vrot.slane %v694, 1
    %v696 = vadd.f32 %v694, %v695
    %v697 = vsel %vm640, %v632, 0.0
    %v698 = vrot.slane %v697, 4
    %v699 = vadd.f32 %v697, %v698
    %v700 = vrot.slane %v699, 2
    %v701 = vadd.f32 %v699, %v700
    %v702 = vrot.slane %v701, 1
    %v703 = vadd.f32 %v701, %v702
    %v704 = vsel %vm640, %v633, 0.0
    %v705 = vrot.slane %v704, 4
    %v706 = vadd.f32 %v704, %v705
    %v707 = vrot.slane %v706, 2
    %v708 = vadd.f32 %v706, %v707
    %v709 = vrot.slane %v708, 1
    %v710 = vadd.f32 %v708, %v709
    %v711 = vsel %vm640, %v634, 0.0
    %v712 = vrot.slane %v711, 4
    %v713 = vadd.f32 %v711, %v712
    %v714 = vrot.slane %v713, 2
    %v715 = vadd.f32 %v713, %v714
    %v716 = vrot.slane %v715, 1
    %v717 = vadd.f32 %v715, %v716
    %v718 = vsel %vm640, %v635, 0.0
    %v719 = vrot.slane %v718, 4
    %v720 = vadd.f32 %v718, %v719
    %v721 = vrot.slane %v720, 2
    %v722 = vadd.f32 %v720, %v721
    %v723 = vrot.slane %v722, 1
    %v724 = vadd.f32 %v722, %v723
    %v725 = vsel %vm640, %v636, 0.0
    %v726 = vrot.slane %v725, 4
    %v727 = vadd.f32 %v725, %v726
    %v728 = vrot.slane %v727, 2
    %v729 = vadd.f32 %v727, %v728
    %v730 = vrot.slane %v729, 1
    %v731 = vadd.f32 %v729, %v730
    %v732 = vsel %vm640, %v637, 0.0
    %v733 = vrot.slane %v732, 4
    %v734 = vadd.f32 %v732, %v733
    %v735 = vrot.slane %v734, 2
    %v736 = vadd.f32 %v734, %v735
    %v737 = vrot.slane %v736, 1
    %v738 = vadd.f32 %v736, %v737
    %v739 = vsel %vm640, %v638, 0.0
    %v740 = vrot.slane %v739, 4
    %v741 = vadd.f32 %v739, %v740
    %v742 = vrot.slane %v741, 2
    %v743 = vadd.f32 %v741, %v742
    %v744 = vrot.slane %v743, 1
    %v745 = vadd.f32 %v743, %v744
    %v746 = vsel %vm640, %v639, 0.0
    %v747 = vrot.slane %v746, 4
    %v748 = vadd.f32 %v746, %v747
    %v749 = vrot.slane %v748, 2
    %v750 = vadd.f32 %v748, %v749
    %v751 = vrot.slane %v750, 1
    %v752 = vadd.f32 %v750, %v751
    %v753 = vld [vmem:[%s4] sm:$0xff]
    %v754 = vld [vmem:[%s4 + $0x8] sm:$0x1f]
    %vm771 = vcmask 1041409
    %v772 = vsel %vm771, %v365, %v358
    %vm773 = vcmask 1042434
    %v774 = vsel %vm773, %v372, %v772
    %vm775 = vcmask 1043459
    %v776 = vsel %vm775, %v379, %v774
    %vm777 = vcmask 1044484
    %v778 = vsel %vm777, %v386, %v776
    %vm779 = vcmask 1045509
    %v780 = vsel %vm779, %v393, %v778
    %vm781 = vcmask 1046534
    %v782 = vsel %vm781, %v400, %v780
    %vm783 = vcmask 1047559
    %v784 = vsel %vm783, %v407, %v782
    %v785 = vsel %vm771, %v421, %v414
    %v786 = vsel %vm773, %v428, %v785
    %v787 = vsel %vm775, %v435, %v786
    %v788 = vsel %vm777, %v442, %v787
    %v789 = vsel %vm779, %v449, %v788
    %v790 = vsel %vm781, %v456, %v789
    %v791 = vsel %vm783, %v463, %v790
    %vm792 = vcmask 105472
    %v793 = vsel %vm792, %v784, 0
    %v795 = vsel %vm792, %v791, 0
    %vm797 = vcmask 1044480
    %v799 = vsel %vm797, %v754, 0
    %801 = vmatprep.subr.mxu0 0.0
    %802 = vmatpush1.msra.mxu0 %v753
    %803 = vmatprep.subr.mxu0 0.0
    %804 = vmatpush1.msra.mxu0 %v799
    %805 = vmatprep.subr.mxu0 0.0
    %806 = vmatpush1.msra.mxu0 0.0
    %807 = vmatprep.subr.mxu0 0.0
    %808 = vmatpush1.msra.mxu0 0.0
    %809 = vmatprep.subr.mxu0 0.0
    %810 = vmatpush1.msra.mxu0 0.0
    %811 = vmatprep.subr.mxu0 0.0
    %812 = vmatpush1.msra.mxu0 0.0
    %813 = vmatprep.subr.mxu0 0.0
    %814 = vmatpush1.msra.mxu0 0.0
    %815 = vmatprep.subr.mxu0 0.0
    %816 = vmatpush1.msra.mxu0 0.0
    %817 = vmatprep.subr.mxu0 0.0
    %818 = vmatpush1.msra.mxu0 0.0
    %819 = vmatprep.subr.mxu0 0.0
    %820 = vmatpush1.msra.mxu0 0.0
    %821 = vmatprep.subr.mxu0 0.0
    %822 = vmatpush1.msra.mxu0 0.0
    %823 = vmatprep.subr.mxu0 0.0
    %824 = vmatpush1.msra.mxu0 0.0
    %825 = vmatprep.subr.mxu0 0.0
    %826 = vmatpush1.msra.mxu0 0.0
    %827 = vmatprep.subr.mxu0 0.0
    %828 = vmatpush1.msra.mxu0 0.0
    %829 = vmatprep.subr.mxu0 0.0
    %830 = vmatpush1.msra.mxu0 0.0
    %831 = vmatprep.subr.mxu0 0.0
    %832 = vmatpush1.msra.mxu0 0.0
    %833 = vmatprep.subr.mxu0 0.0
    %834 = vmatpush1.msra.mxu0 0.0
    %835 = vmatprep.subr.mxu0 0.0
    %836 = vmatpush1.msra.mxu0 0.0
    %837 = vmatprep.subr.mxu0 0.0
    %838 = vmatpush1.msra.mxu0 0.0
    %839 = vmatprep.subr.mxu0 0.0
    %840 = vmatpush1.msra.mxu0 0.0
    %841 = vmatprep.subr.mxu0 0.0
    %842 = vmatpush1.msra.mxu0 0.0
    %843 = vmatprep.subr.mxu0 0.0
    %844 = vmatpush1.msra.mxu0 0.0
    %845 = vmatprep.subr.mxu0 0.0
    %846 = vmatpush1.msra.mxu0 0.0
    %847 = vmatprep.subr.mxu0 0.0
    %848 = vmatpush1.msra.mxu0 0.0
    %849 = vmatprep.subr.mxu0 0.0
    %850 = vmatpush1.msra.mxu0 0.0
    %851 = vmatprep.subr.mxu0 0.0
    %852 = vmatpush1.msra.mxu0 0.0
    %853 = vmatprep.subr.mxu0 0.0
    %854 = vmatpush1.msra.mxu0 0.0
    %855 = vmatprep.subr.mxu0 0.0
    %856 = vmatpush1.msra.mxu0 0.0
    %857 = vmatprep.subr.mxu0 0.0
    %858 = vmatpush1.msra.mxu0 0.0
    %859 = vmatprep.subr.mxu0 0.0
    %860 = vmatpush1.msra.mxu0 0.0
    %861 = vmatprep.subr.mxu0 0.0
    %862 = vmatpush1.msra.mxu0 0.0
    %863 = vmatprep.subr.mxu0 0.0
    %864 = vmatpush1.msra.mxu0 0.0
    %865 = vmatprep.mubr.f32.mxu0 0.0
    %866 = vmatmul.mubr.f32.gmra.mrb[0].mxu0 %v793
    %v867 = vpop.f32.mrb[0].mxu0
    %v868 = vadd.f32 0.0, %v867
    %v869 = vpop.f32.mrb[0].mxu0
    %870 = vmatprep.mubr.f32.mxu0 0.0
    %871 = vmatmul.mubr.f32.gmra.mrb[0].mxu0 %v795
    %v872 = vpop.f32.mrb[0].mxu0
    %v873 = vadd.f32 0.0, %v872
    %v874 = vpop.f32.mrb[0].mxu0
    %875 = vdwg.mxu0
    %v876 = vld [vmem:[%s5] sm:$0xff]
    %v877 = vld [vmem:[%s5 + $0x8] sm:$0x3]
    %v894 = vsel %vm771, %v654, %v647
    %v895 = vsel %vm773, %v661, %v894
    %v896 = vsel %vm775, %v668, %v895
    %v897 = vsel %vm777, %v675, %v896
    %v898 = vsel %vm779, %v682, %v897
    %v899 = vsel %vm781, %v689, %v898
    %v900 = vsel %vm783, %v696, %v899
    %v901 = vsel %vm771, %v710, %v703
    %v902 = vsel %vm773, %v717, %v901
    %v903 = vsel %vm775, %v724, %v902
    %v904 = vsel %vm777, %v731, %v903
    %v905 = vsel %vm779, %v738, %v904
    %v906 = vsel %vm781, %v745, %v905
    %v907 = vsel %vm783, %v752, %v906
    %vm908 = vcmask 80896
    %v909 = vsel %vm908, %v900, 0
    %v911 = vsel %vm908, %v907, 0
    %vm913 = vcmask 1041408
    %v915 = vsel %vm913, %v877, 0
    %917 = vmatprep.subr.mxu0 0.0
    %918 = vmatpush1.msra.mxu0 %v876
    %919 = vmatprep.subr.mxu0 0.0
    %920 = vmatpush1.msra.mxu0 %v915
    %921 = vmatprep.subr.mxu0 0.0
    %922 = vmatpush1.msra.mxu0 0.0
    %923 = vmatprep.subr.mxu0 0.0
    %924 = vmatpush1.msra.mxu0 0.0
    %925 = vmatprep.subr.mxu0 0.0
    %926 = vmatpush1.msra.mxu0 0.0
    %927 = vmatprep.subr.mxu0 0.0
    %928 = vmatpush1.msra.mxu0 0.0
    %929 = vmatprep.subr.mxu0 0.0
    %930 = vmatpush1.msra.mxu0 0.0
    %931 = vmatprep.subr.mxu0 0.0
    %932 = vmatpush1.msra.mxu0 0.0
    %933 = vmatprep.subr.mxu0 0.0
    %934 = vmatpush1.msra.mxu0 0.0
    %935 = vmatprep.subr.mxu0 0.0
    %936 = vmatpush1.msra.mxu0 0.0
    %937 = vmatprep.subr.mxu0 0.0
    %938 = vmatpush1.msra.mxu0 0.0
    %939 = vmatprep.subr.mxu0 0.0
    %940 = vmatpush1.msra.mxu0 0.0
    %941 = vmatprep.subr.mxu0 0.0
    %942 = vmatpush1.msra.mxu0 0.0
    %943 = vmatprep.subr.mxu0 0.0
    %944 = vmatpush1.msra.mxu0 0.0
    %945 = vmatprep.subr.mxu0 0.0
    %946 = vmatpush1.msra.mxu0 0.0
    %947 = vmatprep.subr.mxu0 0.0
    %948 = vmatpush1.msra.mxu0 0.0
    %949 = vmatprep.subr.mxu0 0.0
    %950 = vmatpush1.msra.mxu0 0.0
    %951 = vmatprep.subr.mxu0 0.0
    %952 = vmatpush1.msra.mxu0 0.0
    %953 = vmatprep.subr.mxu0 0.0
    %954 = vmatpush1.msra.mxu0 0.0
    %955 = vmatprep.subr.mxu0 0.0
    %956 = vmatpush1.msra.mxu0 0.0
    %957 = vmatprep.subr.mxu0 0.0
    %958 = vmatpush1.msra.mxu0 0.0
    %959 = vmatprep.subr.mxu0 0.0
    %960 = vmatpush1.msra.mxu0 0.0
    %961 = vmatprep.subr.mxu0 0.0
    %962 = vmatpush1.msra.mxu0 0.0
    %963 = vmatprep.subr.mxu0 0.0
    %964 = vmatpush1.msra.mxu0 0.0
    %965 = vmatprep.subr.mxu0 0.0
    %966 = vmatpush1.msra.mxu0 0.0
    %967 = vmatprep.subr.mxu0 0.0
    %968 = vmatpush1.msra.mxu0 0.0
    %969 = vmatprep.subr.mxu0 0.0
    %970 = vmatpush1.msra.mxu0 0.0
    %971 = vmatprep.subr.mxu0 0.0
    %972 = vmatpush1.msra.mxu0 0.0
    %973 = vmatprep.subr.mxu0 0.0
    %974 = vmatpush1.msra.mxu0 0.0
    %975 = vmatprep.subr.mxu0 0.0
    %976 = vmatpush1.msra.mxu0 0.0
    %977 = vmatprep.subr.mxu0 0.0
    %978 = vmatpush1.msra.mxu0 0.0
    %979 = vmatprep.subr.mxu0 0.0
    %980 = vmatpush1.msra.mxu0 0.0
    %981 = vmatprep.mubr.f32.mxu0 0.0
    %982 = vmatmul.mubr.f32.gmra.mrb[0].mxu0 %v909
    %v983 = vpop.f32.mrb[0].mxu0
    %v984 = vadd.f32 0.0, %v983
    %v985 = vpop.f32.mrb[0].mxu0
    %986 = vmatprep.mubr.f32.mxu0 0.0
    %987 = vmatmul.mubr.f32.gmra.mrb[0].mxu0 %v911
    %v988 = vpop.f32.mrb[0].mxu0
    %v989 = vadd.f32 0.0, %v988
    %v990 = vpop.f32.mrb[0].mxu0
    %991 = vdwg.mxu0
    %v992 = vld [vmem:[%s2] sm:$0xff]
    %v993 = vld [vmem:[%s2 + $0x8] sm:$0xff]
    %994 = vset.pattern.permute.xlu0 0
    %995 = vperm.xlu0 %994, %v992
    %v996 = vpop.permute.xlu0 %995
    %997 = vset.pattern.permute.xlu0 0
    %998 = vperm.xlu0 %997, %v993
    %v999 = vpop.permute.xlu0 %998
    %vm1000 = vcmp.eq.s32.totalorder %v996, %v174
    %vm1001 = vcmp.eq.s32.totalorder %v999, %v174
    %v1002 = vsel %vm1000, 1, 0
    %v1003 = vsel %vm1001, 1, 0
    %v1004 = vcvt.s32.f32 %v1002
    %v1005 = vcvt.s32.f32 %v1003
    %v1006 = vld [vmem:[%s6] sm:$0x7f]
    %vm1007 = vcmask 56320
    %v1009 = vsel %vm1007, %v1004, 0
    %v1012 = vsel %vm1007, %v1005, 0
    %vm1014 = vcmask 1046528
    %v1016 = vsel %vm1014, %v1006, 0
    %1018 = vmatprep.subr.mxu0 0.0
    %1019 = vmatpush1.msra.mxu0 %v1016
    %1020 = vmatprep.subr.mxu0 0.0
    %1021 = vmatpush1.msra.mxu0 0.0
    %1022 = vmatprep.subr.mxu0 0.0
    %1023 = vmatpush1.msra.mxu0 0.0
    %1024 = vmatprep.subr.mxu0 0.0
    %1025 = vmatpush1.msra.mxu0 0.0
    %1026 = vmatprep.subr.mxu0 0.0
    %1027 = vmatpush1.msra.mxu0 0.0
    %1028 = vmatprep.subr.mxu0 0.0
    %1029 = vmatpush1.msra.mxu0 0.0
    %1030 = vmatprep.subr.mxu0 0.0
    %1031 = vmatpush1.msra.mxu0 0.0
    %1032 = vmatprep.subr.mxu0 0.0
    %1033 = vmatpush1.msra.mxu0 0.0
    %1034 = vmatprep.subr.mxu0 0.0
    %1035 = vmatpush1.msra.mxu0 0.0
    %1036 = vmatprep.subr.mxu0 0.0
    %1037 = vmatpush1.msra.mxu0 0.0
    %1038 = vmatprep.subr.mxu0 0.0
    %1039 = vmatpush1.msra.mxu0 0.0
    %1040 = vmatprep.subr.mxu0 0.0
    %1041 = vmatpush1.msra.mxu0 0.0
    %1042 = vmatprep.subr.mxu0 0.0
    %1043 = vmatpush1.msra.mxu0 0.0
    %1044 = vmatprep.subr.mxu0 0.0
    %1045 = vmatpush1.msra.mxu0 0.0
    %1046 = vmatprep.subr.mxu0 0.0
    %1047 = vmatpush1.msra.mxu0 0.0
    %1048 = vmatprep.subr.mxu0 0.0
    %1049 = vmatpush1.msra.mxu0 0.0
    %1050 = vmatprep.subr.mxu0 0.0
    %1051 = vmatpush1.msra.mxu0 0.0
    %1052 = vmatprep.subr.mxu0 0.0
    %1053 = vmatpush1.msra.mxu0 0.0
    %1054 = vmatprep.subr.mxu0 0.0
    %1055 = vmatpush1.msra.mxu0 0.0
    %1056 = vmatprep.subr.mxu0 0.0
    %1057 = vmatpush1.msra.mxu0 0.0
    %1058 = vmatprep.subr.mxu0 0.0
    %1059 = vmatpush1.msra.mxu0 0.0
    %1060 = vmatprep.subr.mxu0 0.0
    %1061 = vmatpush1.msra.mxu0 0.0
    %1062 = vmatprep.subr.mxu0 0.0
    %1063 = vmatpush1.msra.mxu0 0.0
    %1064 = vmatprep.subr.mxu0 0.0
    %1065 = vmatpush1.msra.mxu0 0.0
    %1066 = vmatprep.subr.mxu0 0.0
    %1067 = vmatpush1.msra.mxu0 0.0
    %1068 = vmatprep.subr.mxu0 0.0
    %1069 = vmatpush1.msra.mxu0 0.0
    %1070 = vmatprep.subr.mxu0 0.0
    %1071 = vmatpush1.msra.mxu0 0.0
    %1072 = vmatprep.subr.mxu0 0.0
    %1073 = vmatpush1.msra.mxu0 0.0
    %1074 = vmatprep.subr.mxu0 0.0
    %1075 = vmatpush1.msra.mxu0 0.0
    %1076 = vmatprep.subr.mxu0 0.0
    %1077 = vmatpush1.msra.mxu0 0.0
    %1078 = vmatprep.subr.mxu0 0.0
    %1079 = vmatpush1.msra.mxu0 0.0
    %1080 = vmatprep.subr.mxu0 0.0
    %1081 = vmatpush1.msra.mxu0 0.0
    %1082 = vmatprep.mubr.f32.mxu0 0.0
    %1083 = vmatmul.mubr.f32.gmra.mrb[0].mxu0 %v1009
    %v1084 = vpop.f32.mrb[0].mxu0
    %v1085 = vadd.f32 0.0, %v1084
    %v1086 = vpop.f32.mrb[0].mxu0
    %1087 = vmatprep.mubr.f32.mxu0 0.0
    %1088 = vmatmul.mubr.f32.gmra.mrb[0].mxu0 %v1012
    %v1089 = vpop.f32.mrb[0].mxu0
    %v1090 = vadd.f32 0.0, %v1089
    %v1091 = vpop.f32.mrb[0].mxu0
    %1092 = vdwg.mxu0
    %v1093 = vld [vmem:[%s3] sm:$0x3]
    %1094 = vset.pattern.permute.xlu0 0
    %1095 = vperm.xlu0 %1094, %v1093
    %v1096 = vpop.permute.xlu0 %1095
    %vm1097 = vcmp.eq.s32.totalorder %v1096, %v174
    %v1098 = vsel %vm1097, 1, 0
    %v1099 = vcvt.s32.f32 %v1098
    %v1100 = vld [vmem:[%s7] sm:$0xff]
    %v1101 = vld [vmem:[%s7 + $0x8] sm:$0x3]
    %v1103 = vsel %vm908, %v1099, 0
    %v1106 = vsel %vm913, %v1101, 0
    %1108 = vmatprep.subr.mxu0 0.0
    %1109 = vmatpush1.msra.mxu0 %v1100
    %1110 = vmatprep.subr.mxu0 0.0
    %1111 = vmatpush1.msra.mxu0 %v1106
    %1112 = vmatprep.subr.mxu0 0.0
    %1113 = vmatpush1.msra.mxu0 0.0
    %1114 = vmatprep.subr.mxu0 0.0
    %1115 = vmatpush1.msra.mxu0 0.0
    %1116 = vmatprep.subr.mxu0 0.0
    %1117 = vmatpush1.msra.mxu0 0.0
    %1118 = vmatprep.subr.mxu0 0.0
    %1119 = vmatpush1.msra.mxu0 0.0
    %1120 = vmatprep.subr.mxu0 0.0
    %1121 = vmatpush1.msra.mxu0 0.0
    %1122 = vmatprep.subr.mxu0 0.0
    %1123 = vmatpush1.msra.mxu0 0.0
    %1124 = vmatprep.subr.mxu0 0.0
    %1125 = vmatpush1.msra.mxu0 0.0
    %1126 = vmatprep.subr.mxu0 0.0
    %1127 = vmatpush1.msra.mxu0 0.0
    %1128 = vmatprep.subr.mxu0 0.0
    %1129 = vmatpush1.msra.mxu0 0.0
    %1130 = vmatprep.subr.mxu0 0.0
    %1131 = vmatpush1.msra.mxu0 0.0
    %1132 = vmatprep.subr.mxu0 0.0
    %1133 = vmatpush1.msra.mxu0 0.0
    %1134 = vmatprep.subr.mxu0 0.0
    %1135 = vmatpush1.msra.mxu0 0.0
    %1136 = vmatprep.subr.mxu0 0.0
    %1137 = vmatpush1.msra.mxu0 0.0
    %1138 = vmatprep.subr.mxu0 0.0
    %1139 = vmatpush1.msra.mxu0 0.0
    %1140 = vmatprep.subr.mxu0 0.0
    %1141 = vmatpush1.msra.mxu0 0.0
    %1142 = vmatprep.subr.mxu0 0.0
    %1143 = vmatpush1.msra.mxu0 0.0
    %1144 = vmatprep.subr.mxu0 0.0
    %1145 = vmatpush1.msra.mxu0 0.0
    %1146 = vmatprep.subr.mxu0 0.0
    %1147 = vmatpush1.msra.mxu0 0.0
    %1148 = vmatprep.subr.mxu0 0.0
    %1149 = vmatpush1.msra.mxu0 0.0
    %1150 = vmatprep.subr.mxu0 0.0
    %1151 = vmatpush1.msra.mxu0 0.0
    %1152 = vmatprep.subr.mxu0 0.0
    %1153 = vmatpush1.msra.mxu0 0.0
    %1154 = vmatprep.subr.mxu0 0.0
    %1155 = vmatpush1.msra.mxu0 0.0
    %1156 = vmatprep.subr.mxu0 0.0
    %1157 = vmatpush1.msra.mxu0 0.0
    %1158 = vmatprep.subr.mxu0 0.0
    %1159 = vmatpush1.msra.mxu0 0.0
    %1160 = vmatprep.subr.mxu0 0.0
    %1161 = vmatpush1.msra.mxu0 0.0
    %1162 = vmatprep.subr.mxu0 0.0
    %1163 = vmatpush1.msra.mxu0 0.0
    %1164 = vmatprep.subr.mxu0 0.0
    %1165 = vmatpush1.msra.mxu0 0.0
    %1166 = vmatprep.subr.mxu0 0.0
    %1167 = vmatpush1.msra.mxu0 0.0
    %1168 = vmatprep.subr.mxu0 0.0
    %1169 = vmatpush1.msra.mxu0 0.0
    %1170 = vmatprep.subr.mxu0 0.0
    %1171 = vmatpush1.msra.mxu0 0.0
    %1172 = vmatprep.mubr.f32.mxu0 0.0
    %1173 = vmatmul.mubr.f32.gmra.mrb[0].mxu0 %v1103
    %v1174 = vpop.f32.mrb[0].mxu0
    %v1175 = vadd.f32 0.0, %v1174
    %v1176 = vpop.f32.mrb[0].mxu0
    %1177 = vdwg.mxu0
    %1180 = vrot.lane.b32.xlu0 %v984, 8
    %v1181 = vpop.permute.xlu0 %1180
    %1182 = vrot.lane.b32.xlu0 %v989, 8
    %v1183 = vpop.permute.xlu0 %1182
    %1188 = vrot.lane.b32.xlu0 %v1085, 16
    %v1189 = vpop.permute.xlu0 %1188
    %1190 = vrot.lane.b32.xlu0 %v1090, 16
    %v1191 = vpop.permute.xlu0 %1190
    %vm1194 = vcmask 64512
    %v1195 = vsel %vm1194, %v868, %v1181
    %v1196 = vsel %vm1194, %v873, %v1183
    %vm1197 = vcmask 130048
    %v1198 = vsel %vm1197, %v1195, %v1189
    %v1199 = vsel %vm1197, %v1196, %v1191
    %v1200 = vld [vmem:[%s8] sm:$0xff]
    %v1201 = vld [vmem:[%s8 + $0x8] sm:$0xff]
    %v1202 = vld [vmem:[%s8 + $0x10] sm:$0xff]
    %v1203 = vld [vmem:[%s10] sm:$0x1]
    %v1205 = vlaneseq
    %v1206 = vshrl.u32 %v1205, 7
    %v1207 = vsub.s32 0, %v1206
    %v1208 = vrot.slane %v1203, %v1207
    %vm1210 = vcmask 195584
    %v1212 = vsel %vm1210, %v1198, 0
    %v1215 = vsel %vm1210, %v1199, 0
    %1217 = vmatprep.subr.mxu0 0.0
    %1218 = vmatpush1.msra.mxu0 %v1200
    %1219 = vmatprep.subr.mxu0 0.0
    %1220 = vmatpush1.msra.mxu0 %v1201
    %1221 = vmatprep.subr.mxu0 0.0
    %1222 = vmatpush1.msra.mxu0 %v1202
    %1223 = vmatprep.subr.mxu0 0.0
    %1224 = vmatpush1.msra.mxu0 0.0
    %1225 = vmatprep.subr.mxu0 0.0
    %1226 = vmatpush1.msra.mxu0 0.0
    %1227 = vmatprep.subr.mxu0 0.0
    %1228 = vmatpush1.msra.mxu0 0.0
    %1229 = vmatprep.subr.mxu0 0.0
    %1230 = vmatpush1.msra.mxu0 0.0
    %1231 = vmatprep.subr.mxu0 0.0
    %1232 = vmatpush1.msra.mxu0 0.0
    %1233 = vmatprep.subr.mxu0 0.0
    %1234 = vmatpush1.msra.mxu0 0.0
    %1235 = vmatprep.subr.mxu0 0.0
    %1236 = vmatpush1.msra.mxu0 0.0
    %1237 = vmatprep.subr.mxu0 0.0
    %1238 = vmatpush1.msra.mxu0 0.0
    %1239 = vmatprep.subr.mxu0 0.0
    %1240 = vmatpush1.msra.mxu0 0.0
    %1241 = vmatprep.subr.mxu0 0.0
    %1242 = vmatpush1.msra.mxu0 0.0
    %1243 = vmatprep.subr.mxu0 0.0
    %1244 = vmatpush1.msra.mxu0 0.0
    %1245 = vmatprep.subr.mxu0 0.0
    %1246 = vmatpush1.msra.mxu0 0.0
    %1247 = vmatprep.subr.mxu0 0.0
    %1248 = vmatpush1.msra.mxu0 0.0
    %1249 = vmatprep.subr.mxu0 0.0
    %1250 = vmatpush1.msra.mxu0 0.0
    %1251 = vmatprep.subr.mxu0 0.0
    %1252 = vmatpush1.msra.mxu0 0.0
    %1253 = vmatprep.subr.mxu0 0.0
    %1254 = vmatpush1.msra.mxu0 0.0
    %1255 = vmatprep.subr.mxu0 0.0
    %1256 = vmatpush1.msra.mxu0 0.0
    %1257 = vmatprep.subr.mxu0 0.0
    %1258 = vmatpush1.msra.mxu0 0.0
    %1259 = vmatprep.subr.mxu0 0.0
    %1260 = vmatpush1.msra.mxu0 0.0
    %1261 = vmatprep.subr.mxu0 0.0
    %1262 = vmatpush1.msra.mxu0 0.0
    %1263 = vmatprep.subr.mxu0 0.0
    %1264 = vmatpush1.msra.mxu0 0.0
    %1265 = vmatprep.subr.mxu0 0.0
    %1266 = vmatpush1.msra.mxu0 0.0
    %1267 = vmatprep.subr.mxu0 0.0
    %1268 = vmatpush1.msra.mxu0 0.0
    %1269 = vmatprep.subr.mxu0 0.0
    %1270 = vmatpush1.msra.mxu0 0.0
    %1271 = vmatprep.subr.mxu0 0.0
    %1272 = vmatpush1.msra.mxu0 0.0
    %1273 = vmatprep.subr.mxu0 0.0
    %1274 = vmatpush1.msra.mxu0 0.0
    %1275 = vmatprep.subr.mxu0 0.0
    %1276 = vmatpush1.msra.mxu0 0.0
    %1277 = vmatprep.subr.mxu0 0.0
    %1278 = vmatpush1.msra.mxu0 0.0
    %1279 = vmatprep.subr.mxu0 0.0
    %1280 = vmatpush1.msra.mxu0 0.0
    %1281 = vmatprep.mubr.f32.mxu0 0.0
    %1282 = vmatmul.mubr.f32.gmra.mrb[0].mxu0 %v1212
    %v1283 = vpop.f32.mrb[0].mxu0
    %v1284 = vadd.f32 %v1208, %v1283
    %v1285 = vpop.f32.mrb[0].mxu0
    %1286 = vmatprep.mubr.f32.mxu0 0.0
    %1287 = vmatmul.mubr.f32.gmra.mrb[0].mxu0 %v1215
    %v1288 = vpop.f32.mrb[0].mxu0
    %v1289 = vadd.f32 %v1208, %v1288
    %v1290 = vpop.f32.mrb[0].mxu0
    %1291 = vdwg.mxu0
    %v1292 = vld [vmem:[%s9] sm:$0xff]
    %v1293 = vld [vmem:[%s9 + $0x8] sm:$0xff]
    %v1294 = vld [vmem:[%s9 + $0x10] sm:$0xff]
    %v1295 = vld [vmem:[%s9 + $0x18] sm:$0xff]
    %vm1296 = vcmask 261120
    %v1298 = vsel %vm1296, 0.0, 0
    %1300 = vmatprep.subr.mxu0 0.0
    %1301 = vmatpush1.msra.mxu0 %v1292
    %1302 = vmatprep.subr.mxu0 0.0
    %1303 = vmatpush1.msra.mxu0 %v1293
    %1304 = vmatprep.subr.mxu0 0.0
    %1305 = vmatpush1.msra.mxu0 %v1294
    %1306 = vmatprep.subr.mxu0 0.0
    %1307 = vmatpush1.msra.mxu0 %v1295
    %1308 = vmatprep.subr.mxu0 0.0
    %1309 = vmatpush1.msra.mxu0 0.0
    %1310 = vmatprep.subr.mxu0 0.0
    %1311 = vmatpush1.msra.mxu0 0.0
    %1312 = vmatprep.subr.mxu0 0.0
    %1313 = vmatpush1.msra.mxu0 0.0
    %1314 = vmatprep.subr.mxu0 0.0
    %1315 = vmatpush1.msra.mxu0 0.0
    %1316 = vmatprep.subr.mxu0 0.0
    %1317 = vmatpush1.msra.mxu0 0.0
    %1318 = vmatprep.subr.mxu0 0.0
    %1319 = vmatpush1.msra.mxu0 0.0
    %1320 = vmatprep.subr.mxu0 0.0
    %1321 = vmatpush1.msra.mxu0 0.0
    %1322 = vmatprep.subr.mxu0 0.0
    %1323 = vmatpush1.msra.mxu0 0.0
    %1324 = vmatprep.subr.mxu0 0.0
    %1325 = vmatpush1.msra.mxu0 0.0
    %1326 = vmatprep.subr.mxu0 0.0
    %1327 = vmatpush1.msra.mxu0 0.0
    %1328 = vmatprep.subr.mxu0 0.0
    %1329 = vmatpush1.msra.mxu0 0.0
    %1330 = vmatprep.subr.mxu0 0.0
    %1331 = vmatpush1.msra.mxu0 0.0
    %1332 = vmatprep.subr.mxu0 0.0
    %1333 = vmatpush1.msra.mxu0 0.0
    %1334 = vmatprep.subr.mxu0 0.0
    %1335 = vmatpush1.msra.mxu0 0.0
    %1336 = vmatprep.subr.mxu0 0.0
    %1337 = vmatpush1.msra.mxu0 0.0
    %1338 = vmatprep.subr.mxu0 0.0
    %1339 = vmatpush1.msra.mxu0 0.0
    %1340 = vmatprep.subr.mxu0 0.0
    %1341 = vmatpush1.msra.mxu0 0.0
    %1342 = vmatprep.subr.mxu0 0.0
    %1343 = vmatpush1.msra.mxu0 0.0
    %1344 = vmatprep.subr.mxu0 0.0
    %1345 = vmatpush1.msra.mxu0 0.0
    %1346 = vmatprep.subr.mxu0 0.0
    %1347 = vmatpush1.msra.mxu0 0.0
    %1348 = vmatprep.subr.mxu0 0.0
    %1349 = vmatpush1.msra.mxu0 0.0
    %1350 = vmatprep.subr.mxu0 0.0
    %1351 = vmatpush1.msra.mxu0 0.0
    %1352 = vmatprep.subr.mxu0 0.0
    %1353 = vmatpush1.msra.mxu0 0.0
    %1354 = vmatprep.subr.mxu0 0.0
    %1355 = vmatpush1.msra.mxu0 0.0
    %1356 = vmatprep.subr.mxu0 0.0
    %1357 = vmatpush1.msra.mxu0 0.0
    %1358 = vmatprep.subr.mxu0 0.0
    %1359 = vmatpush1.msra.mxu0 0.0
    %1360 = vmatprep.subr.mxu0 0.0
    %1361 = vmatpush1.msra.mxu0 0.0
    %1362 = vmatprep.subr.mxu0 0.0
    %1363 = vmatpush1.msra.mxu0 0.0
    %1364 = vmatprep.mubr.f32.mxu0 0.0
    %1365 = vmatmul.mubr.f32.gmra.mrb[0].mxu0 %v1298
    %v1366 = vpop.f32.mrb[0].mxu0
    %v1367 = vadd.f32 0.0, %v1366
    %v1368 = vpop.f32.mrb[0].mxu0
    %1369 = vdwg.mxu0
    %v1370 = vadd.f32 %v1284, %v1367
    %v1371 = vxor.u32 %v1370, 2147483648
    %v1372 = vmul.f32 %v1371, 1.442695
    %v1373 = vpow.pop %v1372
    %v1374 = vadd.f32 %v1373, 1.0
    %v1375 = vrcp.pop %v1374
    %v1376 = vmul.f32 1.0, %v1375
    %v1377 = vtanh.pop %v1370
    %v1378 = vmul.f32 %v1376, 0.0
    %1380 = vrot.lane.b32.xlu0 %v1377, 32
    %v1381 = vpop.permute.xlu0 %1380
    %v1383 = vmul.f32 %v1376, %v1381
    %1385 = vrot.lane.b32.xlu0 %v1383, 32
    %v1386 = vpop.permute.xlu0 %1385
    %v1388 = vadd.f32 %v1378, %v1386
    %v1389 = vtanh.pop %v1388
    %1391 = vrot.lane.b32.xlu0 %v1389, 32
    %v1392 = vpop.permute.xlu0 %1391
    %v1394 = vmul.f32 %v1376, %v1392
    %1396 = vrot.lane.b32.xlu0 %v1394, 64
    %v1397 = vpop.permute.xlu0 %1396
    %v1398 = vsel %vm1296, %v1397, 0
    %1400 = vmatprep.subr.mxu0 0.0
    %1401 = vmatpush1.msra.mxu0 %v1292
    %1402 = vmatprep.subr.mxu0 0.0
    %1403 = vmatpush1.msra.mxu0 %v1293
    %1404 = vmatprep.subr.mxu0 0.0
    %1405 = vmatpush1.msra.mxu0 %v1294
    %1406 = vmatprep.subr.mxu0 0.0
    %1407 = vmatpush1.msra.mxu0 %v1295
    %1408 = vmatprep.subr.mxu0 0.0
    %1409 = vmatpush1.msra.mxu0 0.0
    %1410 = vmatprep.subr.mxu0 0.0
    %1411 = vmatpush1.msra.mxu0 0.0
    %1412 = vmatprep.subr.mxu0 0.0
    %1413 = vmatpush1.msra.mxu0 0.0
    %1414 = vmatprep.subr.mxu0 0.0
    %1415 = vmatpush1.msra.mxu0 0.0
    %1416 = vmatprep.subr.mxu0 0.0
    %1417 = vmatpush1.msra.mxu0 0.0
    %1418 = vmatprep.subr.mxu0 0.0
    %1419 = vmatpush1.msra.mxu0 0.0
    %1420 = vmatprep.subr.mxu0 0.0
    %1421 = vmatpush1.msra.mxu0 0.0
    %1422 = vmatprep.subr.mxu0 0.0
    %1423 = vmatpush1.msra.mxu0 0.0
    %1424 = vmatprep.subr.mxu0 0.0
    %1425 = vmatpush1.msra.mxu0 0.0
    %1426 = vmatprep.subr.mxu0 0.0
    %1427 = vmatpush1.msra.mxu0 0.0
    %1428 = vmatprep.subr.mxu0 0.0
    %1429 = vmatpush1.msra.mxu0 0.0
    %1430 = vmatprep.subr.mxu0 0.0
    %1431 = vmatpush1.msra.mxu0 0.0
    %1432 = vmatprep.subr.mxu0 0.0
    %1433 = vmatpush1.msra.mxu0 0.0
    %1434 = vmatprep.subr.mxu0 0.0
    %1435 = vmatpush1.msra.mxu0 0.0
    %1436 = vmatprep.subr.mxu0 0.0
    %1437 = vmatpush1.msra.mxu0 0.0
    %1438 = vmatprep.subr.mxu0 0.0
    %1439 = vmatpush1.msra.mxu0 0.0
    %1440 = vmatprep.subr.mxu0 0.0
    %1441 = vmatpush1.msra.mxu0 0.0
    %1442 = vmatprep.subr.mxu0 0.0
    %1443 = vmatpush1.msra.mxu0 0.0
    %1444 = vmatprep.subr.mxu0 0.0
    %1445 = vmatpush1.msra.mxu0 0.0
    %1446 = vmatprep.subr.mxu0 0.0
    %1447 = vmatpush1.msra.mxu0 0.0
    %1448 = vmatprep.subr.mxu0 0.0
    %1449 = vmatpush1.msra.mxu0 0.0
    %1450 = vmatprep.subr.mxu0 0.0
    %1451 = vmatpush1.msra.mxu0 0.0
    %1452 = vmatprep.subr.mxu0 0.0
    %1453 = vmatpush1.msra.mxu0 0.0
    %1454 = vmatprep.subr.mxu0 0.0
    %1455 = vmatpush1.msra.mxu0 0.0
    %1456 = vmatprep.subr.mxu0 0.0
    %1457 = vmatpush1.msra.mxu0 0.0
    %1458 = vmatprep.subr.mxu0 0.0
    %1459 = vmatpush1.msra.mxu0 0.0
    %1460 = vmatprep.subr.mxu0 0.0
    %1461 = vmatpush1.msra.mxu0 0.0
    %1462 = vmatprep.subr.mxu0 0.0
    %1463 = vmatpush1.msra.mxu0 0.0
    %1464 = vmatprep.mubr.f32.mxu0 0.0
    %1465 = vmatmul.mubr.f32.gmra.mrb[0].mxu0 %v1398
    %v1466 = vpop.f32.mrb[0].mxu0
    %v1467 = vadd.f32 0.0, %v1466
    %v1468 = vpop.f32.mrb[0].mxu0
    %1469 = vdwg.mxu0
    %v1471 = vrot.slane %v1467, 6
    %v1473 = vadd.f32 %v1284, %v1471
    %v1474 = vxor.u32 %v1473, 2147483648
    %v1475 = vmul.f32 %v1474, 1.442695
    %v1476 = vpow.pop %v1475
    %v1477 = vadd.f32 %v1476, 1.0
    %v1478 = vrcp.pop %v1477
    %v1479 = vmul.f32 1.0, %v1478
    %v1480 = vtanh.pop %v1473
    %v1482 = vrot.slane %v1388, 6
    %v1484 = vmul.f32 %v1479, %v1482
    %1486 = vrot.lane.b32.xlu0 %v1480, 32
    %v1487 = vpop.permute.xlu0 %1486
    %v1489 = vmul.f32 %v1479, %v1487
    %1491 = vrot.lane.b32.xlu0 %v1489, 32
    %v1492 = vpop.permute.xlu0 %1491
    %v1494 = vadd.f32 %v1484, %v1492
    %v1495 = vtanh.pop %v1494
    %1497 = vrot.lane.b32.xlu0 %v1495, 32
    %v1498 = vpop.permute.xlu0 %1497
    %v1500 = vmul.f32 %v1479, %v1498
    %v1502 = vrot.slane %v1500, 2
    %1503 = vrot.lane.b32.xlu0 %v1502, 64
    %v1504 = vpop.permute.xlu0 %1503
    %v1505 = vsel %vm1296, %v1504, 0
    %1507 = vmatprep.subr.mxu0 0.0
    %1508 = vmatpush1.msra.mxu0 %v1292
    %1509 = vmatprep.subr.mxu0 0.0
    %1510 = vmatpush1.msra.mxu0 %v1293
    %1511 = vmatprep.subr.mxu0 0.0
    %1512 = vmatpush1.msra.mxu0 %v1294
    %1513 = vmatprep.subr.mxu0 0.0
    %1514 = vmatpush1.msra.mxu0 %v1295
    %1515 = vmatprep.subr.mxu0 0.0
    %1516 = vmatpush1.msra.mxu0 0.0
    %1517 = vmatprep.subr.mxu0 0.0
    %1518 = vmatpush1.msra.mxu0 0.0
    %1519 = vmatprep.subr.mxu0 0.0
    %1520 = vmatpush1.msra.mxu0 0.0
    %1521 = vmatprep.subr.mxu0 0.0
    %1522 = vmatpush1.msra.mxu0 0.0
    %1523 = vmatprep.subr.mxu0 0.0
    %1524 = vmatpush1.msra.mxu0 0.0
    %1525 = vmatprep.subr.mxu0 0.0
    %1526 = vmatpush1.msra.mxu0 0.0
    %1527 = vmatprep.subr.mxu0 0.0
    %1528 = vmatpush1.msra.mxu0 0.0
    %1529 = vmatprep.subr.mxu0 0.0
    %1530 = vmatpush1.msra.mxu0 0.0
    %1531 = vmatprep.subr.mxu0 0.0
    %1532 = vmatpush1.msra.mxu0 0.0
    %1533 = vmatprep.subr.mxu0 0.0
    %1534 = vmatpush1.msra.mxu0 0.0
    %1535 = vmatprep.subr.mxu0 0.0
    %1536 = vmatpush1.msra.mxu0 0.0
    %1537 = vmatprep.subr.mxu0 0.0
    %1538 = vmatpush1.msra.mxu0 0.0
    %1539 = vmatprep.subr.mxu0 0.0
    %1540 = vmatpush1.msra.mxu0 0.0
    %1541 = vmatprep.subr.mxu0 0.0
    %1542 = vmatpush1.msra.mxu0 0.0
    %1543 = vmatprep.subr.mxu0 0.0
    %1544 = vmatpush1.msra.mxu0 0.0
    %1545 = vmatprep.subr.mxu0 0.0
    %1546 = vmatpush1.msra.mxu0 0.0
    %1547 = vmatprep.subr.mxu0 0.0
    %1548 = vmatpush1.msra.mxu0 0.0
    %1549 = vmatprep.subr.mxu0 0.0
    %1550 = vmatpush1.msra.mxu0 0.0
    %1551 = vmatprep.subr.mxu0 0.0
    %1552 = vmatpush1.msra.mxu0 0.0
    %1553 = vmatprep.subr.mxu0 0.0
    %1554 = vmatpush1.msra.mxu0 0.0
    %1555 = vmatprep.subr.mxu0 0.0
    %1556 = vmatpush1.msra.mxu0 0.0
    %1557 = vmatprep.subr.mxu0 0.0
    %1558 = vmatpush1.msra.mxu0 0.0
    %1559 = vmatprep.subr.mxu0 0.0
    %1560 = vmatpush1.msra.mxu0 0.0
    %1561 = vmatprep.subr.mxu0 0.0
    %1562 = vmatpush1.msra.mxu0 0.0
    %1563 = vmatprep.subr.mxu0 0.0
    %1564 = vmatpush1.msra.mxu0 0.0
    %1565 = vmatprep.subr.mxu0 0.0
    %1566 = vmatpush1.msra.mxu0 0.0
    %1567 = vmatprep.subr.mxu0 0.0
    %1568 = vmatpush1.msra.mxu0 0.0
    %1569 = vmatprep.subr.mxu0 0.0
    %1570 = vmatpush1.msra.mxu0 0.0
    %1571 = vmatprep.mubr.f32.mxu0 0.0
    %1572 = vmatmul.mubr.f32.gmra.mrb[0].mxu0 %v1505
    %v1573 = vpop.f32.mrb[0].mxu0
    %v1574 = vadd.f32 0.0, %v1573
    %v1575 = vpop.f32.mrb[0].mxu0
    %1576 = vdwg.mxu0
    %v1578 = vrot.slane %v1574, 4
    %v1580 = vadd.f32 %v1284, %v1578
    %v1581 = vxor.u32 %v1580, 2147483648
    %v1582 = vmul.f32 %v1581, 1.442695
    %v1583 = vpow.pop %v1582
    %v1584 = vadd.f32 %v1583, 1.0
    %v1585 = vrcp.pop %v1584
    %v1586 = vmul.f32 1.0, %v1585
    %v1587 = vtanh.pop %v1580
    %v1589 = vrot.slane %v1494, 6
    %v1591 = vmul.f32 %v1586, %v1589
    %1593 = vrot.lane.b32.xlu0 %v1587, 32
    %v1594 = vpop.permute.xlu0 %1593
    %v1596 = vmul.f32 %v1586, %v1594
    %1598 = vrot.lane.b32.xlu0 %v1596, 32
    %v1599 = vpop.permute.xlu0 %1598
    %v1601 = vadd.f32 %v1591, %v1599
    %v1602 = vtanh.pop %v1601
    %1604 = vrot.lane.b32.xlu0 %v1602, 32
    %v1605 = vpop.permute.xlu0 %1604
    %v1607 = vmul.f32 %v1586, %v1605
    %v1609 = vrot.slane %v1607, 4
    %1610 = vrot.lane.b32.xlu0 %v1609, 64
    %v1611 = vpop.permute.xlu0 %1610
    %v1612 = vsel %vm1296, %v1611, 0
    %1614 = vmatprep.subr.mxu0 0.0
    %1615 = vmatpush1.msra.mxu0 %v1292
    %1616 = vmatprep.subr.mxu0 0.0
    %1617 = vmatpush1.msra.mxu0 %v1293
    %1618 = vmatprep.subr.mxu0 0.0
    %1619 = vmatpush1.msra.mxu0 %v1294
    %1620 = vmatprep.subr.mxu0 0.0
    %1621 = vmatpush1.msra.mxu0 %v1295
    %1622 = vmatprep.subr.mxu0 0.0
    %1623 = vmatpush1.msra.mxu0 0.0
    %1624 = vmatprep.subr.mxu0 0.0
    %1625 = vmatpush1.msra.mxu0 0.0
    %1626 = vmatprep.subr.mxu0 0.0
    %1627 = vmatpush1.msra.mxu0 0.0
    %1628 = vmatprep.subr.mxu0 0.0
    %1629 = vmatpush1.msra.mxu0 0.0
    %1630 = vmatprep.subr.mxu0 0.0
    %1631 = vmatpush1.msra.mxu0 0.0
    %1632 = vmatprep.subr.mxu0 0.0
    %1633 = vmatpush1.msra.mxu0 0.0
    %1634 = vmatprep.subr.mxu0 0.0
    %1635 = vmatpush1.msra.mxu0 0.0
    %1636 = vmatprep.subr.mxu0 0.0
    %1637 = vmatpush1.msra.mxu0 0.0
    %1638 = vmatprep.subr.mxu0 0.0
    %1639 = vmatpush1.msra.mxu0 0.0
    %1640 = vmatprep.subr.mxu0 0.0
    %1641 = vmatpush1.msra.mxu0 0.0
    %1642 = vmatprep.subr.mxu0 0.0
    %1643 = vmatpush1.msra.mxu0 0.0
    %1644 = vmatprep.subr.mxu0 0.0
    %1645 = vmatpush1.msra.mxu0 0.0
    %1646 = vmatprep.subr.mxu0 0.0
    %1647 = vmatpush1.msra.mxu0 0.0
    %1648 = vmatprep.subr.mxu0 0.0
    %1649 = vmatpush1.msra.mxu0 0.0
    %1650 = vmatprep.subr.mxu0 0.0
    %1651 = vmatpush1.msra.mxu0 0.0
    %1652 = vmatprep.subr.mxu0 0.0
    %1653 = vmatpush1.msra.mxu0 0.0
    %1654 = vmatprep.subr.mxu0 0.0
    %1655 = vmatpush1.msra.mxu0 0.0
    %1656 = vmatprep.subr.mxu0 0.0
    %1657 = vmatpush1.msra.mxu0 0.0
    %1658 = vmatprep.subr.mxu0 0.0
    %1659 = vmatpush1.msra.mxu0 0.0
    %1660 = vmatprep.subr.mxu0 0.0
    %1661 = vmatpush1.msra.mxu0 0.0
    %1662 = vmatprep.subr.mxu0 0.0
    %1663 = vmatpush1.msra.mxu0 0.0
    %1664 = vmatprep.subr.mxu0 0.0
    %1665 = vmatpush1.msra.mxu0 0.0
    %1666 = vmatprep.subr.mxu0 0.0
    %1667 = vmatpush1.msra.mxu0 0.0
    %1668 = vmatprep.subr.mxu0 0.0
    %1669 = vmatpush1.msra.mxu0 0.0
    %1670 = vmatprep.subr.mxu0 0.0
    %1671 = vmatpush1.msra.mxu0 0.0
    %1672 = vmatprep.subr.mxu0 0.0
    %1673 = vmatpush1.msra.mxu0 0.0
    %1674 = vmatprep.subr.mxu0 0.0
    %1675 = vmatpush1.msra.mxu0 0.0
    %1676 = vmatprep.subr.mxu0 0.0
    %1677 = vmatpush1.msra.mxu0 0.0
    %1678 = vmatprep.mubr.f32.mxu0 0.0
    %1679 = vmatmul.mubr.f32.gmra.mrb[0].mxu0 %v1612
    %v1680 = vpop.f32.mrb[0].mxu0
    %v1681 = vadd.f32 0.0, %v1680
    %v1682 = vpop.f32.mrb[0].mxu0
    %1683 = vdwg.mxu0
    %v1685 = vrot.slane %v1681, 2
    %v1687 = vadd.f32 %v1284, %v1685
    %v1688 = vxor.u32 %v1687, 2147483648
    %v1689 = vmul.f32 %v1688, 1.442695
    %v1690 = vpow.pop %v1689
    %v1691 = vadd.f32 %v1690, 1.0
    %v1692 = vrcp.pop %v1691
    %v1693 = vmul.f32 1.0, %v1692
    %v1694 = vtanh.pop %v1687
    %v1696 = vrot.slane %v1601, 6
    %v1698 = vmul.f32 %v1693, %v1696
    %1700 = vrot.lane.b32.xlu0 %v1694, 32
    %v1701 = vpop.permute.xlu0 %1700
    %v1703 = vmul.f32 %v1693, %v1701
    %1705 = vrot.lane.b32.xlu0 %v1703, 32
    %v1706 = vpop.permute.xlu0 %1705
    %v1708 = vadd.f32 %v1698, %v1706
    %v1709 = vtanh.pop %v1708
    %1711 = vrot.lane.b32.xlu0 %v1709, 32
    %v1712 = vpop.permute.xlu0 %1711
    %v1714 = vmul.f32 %v1693, %v1712
    %v1716 = vrot.slane %v1714, 6
    %1717 = vrot.lane.b32.xlu0 %v1716, 64
    %v1718 = vpop.permute.xlu0 %1717
    %v1719 = vsel %vm1296, %v1718, 0
    %1721 = vmatprep.subr.mxu0 0.0
    %1722 = vmatpush1.msra.mxu0 %v1292
    %1723 = vmatprep.subr.mxu0 0.0
    %1724 = vmatpush1.msra.mxu0 %v1293
    %1725 = vmatprep.subr.mxu0 0.0
    %1726 = vmatpush1.msra.mxu0 %v1294
    %1727 = vmatprep.subr.mxu0 0.0
    %1728 = vmatpush1.msra.mxu0 %v1295
    %1729 = vmatprep.subr.mxu0 0.0
    %1730 = vmatpush1.msra.mxu0 0.0
    %1731 = vmatprep.subr.mxu0 0.0
    %1732 = vmatpush1.msra.mxu0 0.0
    %1733 = vmatprep.subr.mxu0 0.0
    %1734 = vmatpush1.msra.mxu0 0.0
    %1735 = vmatprep.subr.mxu0 0.0
    %1736 = vmatpush1.msra.mxu0 0.0
    %1737 = vmatprep.subr.mxu0 0.0
    %1738 = vmatpush1.msra.mxu0 0.0
    %1739 = vmatprep.subr.mxu0 0.0
    %1740 = vmatpush1.msra.mxu0 0.0
    %1741 = vmatprep.subr.mxu0 0.0
    %1742 = vmatpush1.msra.mxu0 0.0
    %1743 = vmatprep.subr.mxu0 0.0
    %1744 = vmatpush1.msra.mxu0 0.0
    %1745 = vmatprep.subr.mxu0 0.0
    %1746 = vmatpush1.msra.mxu0 0.0
    %1747 = vmatprep.subr.mxu0 0.0
    %1748 = vmatpush1.msra.mxu0 0.0
    %1749 = vmatprep.subr.mxu0 0.0
    %1750 = vmatpush1.msra.mxu0 0.0
    %1751 = vmatprep.subr.mxu0 0.0
    %1752 = vmatpush1.msra.mxu0 0.0
    %1753 = vmatprep.subr.mxu0 0.0
    %1754 = vmatpush1.msra.mxu0 0.0
    %1755 = vmatprep.subr.mxu0 0.0
    %1756 = vmatpush1.msra.mxu0 0.0
    %1757 = vmatprep.subr.mxu0 0.0
    %1758 = vmatpush1.msra.mxu0 0.0
    %1759 = vmatprep.subr.mxu0 0.0
    %1760 = vmatpush1.msra.mxu0 0.0
    %1761 = vmatprep.subr.mxu0 0.0
    %1762 = vmatpush1.msra.mxu0 0.0
    %1763 = vmatprep.subr.mxu0 0.0
    %1764 = vmatpush1.msra.mxu0 0.0
    %1765 = vmatprep.subr.mxu0 0.0
    %1766 = vmatpush1.msra.mxu0 0.0
    %1767 = vmatprep.subr.mxu0 0.0
    %1768 = vmatpush1.msra.mxu0 0.0
    %1769 = vmatprep.subr.mxu0 0.0
    %1770 = vmatpush1.msra.mxu0 0.0
    %1771 = vmatprep.subr.mxu0 0.0
    %1772 = vmatpush1.msra.mxu0 0.0
    %1773 = vmatprep.subr.mxu0 0.0
    %1774 = vmatpush1.msra.mxu0 0.0
    %1775 = vmatprep.subr.mxu0 0.0
    %1776 = vmatpush1.msra.mxu0 0.0
    %1777 = vmatprep.subr.mxu0 0.0
    %1778 = vmatpush1.msra.mxu0 0.0
    %1779 = vmatprep.subr.mxu0 0.0
    %1780 = vmatpush1.msra.mxu0 0.0
    %1781 = vmatprep.subr.mxu0 0.0
    %1782 = vmatpush1.msra.mxu0 0.0
    %1783 = vmatprep.subr.mxu0 0.0
    %1784 = vmatpush1.msra.mxu0 0.0
    %1785 = vmatprep.mubr.f32.mxu0 0.0
    %1786 = vmatmul.mubr.f32.gmra.mrb[0].mxu0 %v1719
    %v1787 = vpop.f32.mrb[0].mxu0
    %v1788 = vadd.f32 0.0, %v1787
    %v1789 = vpop.f32.mrb[0].mxu0
    %1790 = vdwg.mxu0
    %v1791 = vadd.f32 %v1289, %v1788
    %v1792 = vxor.u32 %v1791, 2147483648
    %v1793 = vmul.f32 %v1792, 1.442695
    %v1794 = vpow.pop %v1793
    %v1795 = vadd.f32 %v1794, 1.0
    %v1796 = vrcp.pop %v1795
    %v1797 = vmul.f32 1.0, %v1796
    %v1798 = vtanh.pop %v1791
    %v1800 = vrot.slane %v1708, 6
    %v1802 = vmul.f32 %v1797, %v1800
    %1804 = vrot.lane.b32.xlu0 %v1798, 32
    %v1805 = vpop.permute.xlu0 %1804
    %v1807 = vmul.f32 %v1797, %v1805
    %1809 = vrot.lane.b32.xlu0 %v1807, 32
    %v1810 = vpop.permute.xlu0 %1809
    %v1812 = vadd.f32 %v1802, %v1810
    %v1813 = vtanh.pop %v1812
    %1815 = vrot.lane.b32.xlu0 %v1813, 32
    %v1816 = vpop.permute.xlu0 %1815
    %v1818 = vmul.f32 %v1797, %v1816
    %1820 = vrot.lane.b32.xlu0 %v1818, 64
    %v1821 = vpop.permute.xlu0 %1820
    %v1822 = vsel %vm1296, %v1821, 0
    %1824 = vmatprep.subr.mxu0 0.0
    %1825 = vmatpush1.msra.mxu0 %v1292
    %1826 = vmatprep.subr.mxu0 0.0
    %1827 = vmatpush1.msra.mxu0 %v1293
    %1828 = vmatprep.subr.mxu0 0.0
    %1829 = vmatpush1.msra.mxu0 %v1294
    %1830 = vmatprep.subr.mxu0 0.0
    %1831 = vmatpush1.msra.mxu0 %v1295
    %1832 = vmatprep.subr.mxu0 0.0
    %1833 = vmatpush1.msra.mxu0 0.0
    %1834 = vmatprep.subr.mxu0 0.0
    %1835 = vmatpush1.msra.mxu0 0.0
    %1836 = vmatprep.subr.mxu0 0.0
    %1837 = vmatpush1.msra.mxu0 0.0
    %1838 = vmatprep.subr.mxu0 0.0
    %1839 = vmatpush1.msra.mxu0 0.0
    %1840 = vmatprep.subr.mxu0 0.0
    %1841 = vmatpush1.msra.mxu0 0.0
    %1842 = vmatprep.subr.mxu0 0.0
    %1843 = vmatpush1.msra.mxu0 0.0
    %1844 = vmatprep.subr.mxu0 0.0
    %1845 = vmatpush1.msra.mxu0 0.0
    %1846 = vmatprep.subr.mxu0 0.0
    %1847 = vmatpush1.msra.mxu0 0.0
    %1848 = vmatprep.subr.mxu0 0.0
    %1849 = vmatpush1.msra.mxu0 0.0
    %1850 = vmatprep.subr.mxu0 0.0
    %1851 = vmatpush1.msra.mxu0 0.0
    %1852 = vmatprep.subr.mxu0 0.0
    %1853 = vmatpush1.msra.mxu0 0.0
    %1854 = vmatprep.subr.mxu0 0.0
    %1855 = vmatpush1.msra.mxu0 0.0
    %1856 = vmatprep.subr.mxu0 0.0
    %1857 = vmatpush1.msra.mxu0 0.0
    %1858 = vmatprep.subr.mxu0 0.0
    %1859 = vmatpush1.msra.mxu0 0.0
    %1860 = vmatprep.subr.mxu0 0.0
    %1861 = vmatpush1.msra.mxu0 0.0
    %1862 = vmatprep.subr.mxu0 0.0
    %1863 = vmatpush1.msra.mxu0 0.0
    %1864 = vmatprep.subr.mxu0 0.0
    %1865 = vmatpush1.msra.mxu0 0.0
    %1866 = vmatprep.subr.mxu0 0.0
    %1867 = vmatpush1.msra.mxu0 0.0
    %1868 = vmatprep.subr.mxu0 0.0
    %1869 = vmatpush1.msra.mxu0 0.0
    %1870 = vmatprep.subr.mxu0 0.0
    %1871 = vmatpush1.msra.mxu0 0.0
    %1872 = vmatprep.subr.mxu0 0.0
    %1873 = vmatpush1.msra.mxu0 0.0
    %1874 = vmatprep.subr.mxu0 0.0
    %1875 = vmatpush1.msra.mxu0 0.0
    %1876 = vmatprep.subr.mxu0 0.0
    %1877 = vmatpush1.msra.mxu0 0.0
    %1878 = vmatprep.subr.mxu0 0.0
    %1879 = vmatpush1.msra.mxu0 0.0
    %1880 = vmatprep.subr.mxu0 0.0
    %1881 = vmatpush1.msra.mxu0 0.0
    %1882 = vmatprep.subr.mxu0 0.0
    %1883 = vmatpush1.msra.mxu0 0.0
    %1884 = vmatprep.subr.mxu0 0.0
    %1885 = vmatpush1.msra.mxu0 0.0
    %1886 = vmatprep.subr.mxu0 0.0
    %1887 = vmatpush1.msra.mxu0 0.0
    %1888 = vmatprep.mubr.f32.mxu0 0.0
    %1889 = vmatmul.mubr.f32.gmra.mrb[0].mxu0 %v1822
    %v1890 = vpop.f32.mrb[0].mxu0
    %v1891 = vadd.f32 0.0, %v1890
    %v1892 = vpop.f32.mrb[0].mxu0
    %1893 = vdwg.mxu0
    %v1895 = vrot.slane %v1891, 6
    %v1897 = vadd.f32 %v1289, %v1895
    %v1898 = vxor.u32 %v1897, 2147483648
    %v1899 = vmul.f32 %v1898, 1.442695
    %v1900 = vpow.pop %v1899
    %v1901 = vadd.f32 %v1900, 1.0
    %v1902 = vrcp.pop %v1901
    %v1903 = vmul.f32 1.0, %v1902
    %v1904 = vtanh.pop %v1897
    %v1906 = vrot.slane %v1812, 6
    %v1908 = vmul.f32 %v1903, %v1906
    %1910 = vrot.lane.b32.xlu0 %v1904, 32
    %v1911 = vpop.permute.xlu0 %1910
    %v1913 = vmul.f32 %v1903, %v1911
    %1915 = vrot.lane.b32.xlu0 %v1913, 32
    %v1916 = vpop.permute.xlu0 %1915
    %v1918 = vadd.f32 %v1908, %v1916
    %v1919 = vtanh.pop %v1918
    %1921 = vrot.lane.b32.xlu0 %v1919, 32
    %v1922 = vpop.permute.xlu0 %1921
    %v1924 = vmul.f32 %v1903, %v1922
    %v1926 = vrot.slane %v1924, 2
    %1927 = vrot.lane.b32.xlu0 %v1926, 64
    %v1928 = vpop.permute.xlu0 %1927
    %v1929 = vsel %vm1296, %v1928, 0
    %1931 = vmatprep.subr.mxu0 0.0
    %1932 = vmatpush1.msra.mxu0 %v1292
    %1933 = vmatprep.subr.mxu0 0.0
    %1934 = vmatpush1.msra.mxu0 %v1293
    %1935 = vmatprep.subr.mxu0 0.0
    %1936 = vmatpush1.msra.mxu0 %v1294
    %1937 = vmatprep.subr.mxu0 0.0
    %1938 = vmatpush1.msra.mxu0 %v1295
    %1939 = vmatprep.subr.mxu0 0.0
    %1940 = vmatpush1.msra.mxu0 0.0
    %1941 = vmatprep.subr.mxu0 0.0
    %1942 = vmatpush1.msra.mxu0 0.0
    %1943 = vmatprep.subr.mxu0 0.0
    %1944 = vmatpush1.msra.mxu0 0.0
    %1945 = vmatprep.subr.mxu0 0.0
    %1946 = vmatpush1.msra.mxu0 0.0
    %1947 = vmatprep.subr.mxu0 0.0
    %1948 = vmatpush1.msra.mxu0 0.0
    %1949 = vmatprep.subr.mxu0 0.0
    %1950 = vmatpush1.msra.mxu0 0.0
    %1951 = vmatprep.subr.mxu0 0.0
    %1952 = vmatpush1.msra.mxu0 0.0
    %1953 = vmatprep.subr.mxu0 0.0
    %1954 = vmatpush1.msra.mxu0 0.0
    %1955 = vmatprep.subr.mxu0 0.0
    %1956 = vmatpush1.msra.mxu0 0.0
    %1957 = vmatprep.subr.mxu0 0.0
    %1958 = vmatpush1.msra.mxu0 0.0
    %1959 = vmatprep.subr.mxu0 0.0
    %1960 = vmatpush1.msra.mxu0 0.0
    %1961 = vmatprep.subr.mxu0 0.0
    %1962 = vmatpush1.msra.mxu0 0.0
    %1963 = vmatprep.subr.mxu0 0.0
    %1964 = vmatpush1.msra.mxu0 0.0
    %1965 = vmatprep.subr.mxu0 0.0
    %1966 = vmatpush1.msra.mxu0 0.0
    %1967 = vmatprep.subr.mxu0 0.0
    %1968 = vmatpush1.msra.mxu0 0.0
    %1969 = vmatprep.subr.mxu0 0.0
    %1970 = vmatpush1.msra.mxu0 0.0
    %1971 = vmatprep.subr.mxu0 0.0
    %1972 = vmatpush1.msra.mxu0 0.0
    %1973 = vmatprep.subr.mxu0 0.0
    %1974 = vmatpush1.msra.mxu0 0.0
    %1975 = vmatprep.subr.mxu0 0.0
    %1976 = vmatpush1.msra.mxu0 0.0
    %1977 = vmatprep.subr.mxu0 0.0
    %1978 = vmatpush1.msra.mxu0 0.0
    %1979 = vmatprep.subr.mxu0 0.0
    %1980 = vmatpush1.msra.mxu0 0.0
    %1981 = vmatprep.subr.mxu0 0.0
    %1982 = vmatpush1.msra.mxu0 0.0
    %1983 = vmatprep.subr.mxu0 0.0
    %1984 = vmatpush1.msra.mxu0 0.0
    %1985 = vmatprep.subr.mxu0 0.0
    %1986 = vmatpush1.msra.mxu0 0.0
    %1987 = vmatprep.subr.mxu0 0.0
    %1988 = vmatpush1.msra.mxu0 0.0
    %1989 = vmatprep.subr.mxu0 0.0
    %1990 = vmatpush1.msra.mxu0 0.0
    %1991 = vmatprep.subr.mxu0 0.0
    %1992 = vmatpush1.msra.mxu0 0.0
    %1993 = vmatprep.subr.mxu0 0.0
    %1994 = vmatpush1.msra.mxu0 0.0
    %1995 = vmatprep.mubr.f32.mxu0 0.0
    %1996 = vmatmul.mubr.f32.gmra.mrb[0].mxu0 %v1929
    %v1997 = vpop.f32.mrb[0].mxu0
    %v1998 = vadd.f32 0.0, %v1997
    %v1999 = vpop.f32.mrb[0].mxu0
    %2000 = vdwg.mxu0
    %v2002 = vrot.slane %v1998, 4
    %v2004 = vadd.f32 %v1289, %v2002
    %v2005 = vxor.u32 %v2004, 2147483648
    %v2006 = vmul.f32 %v2005, 1.442695
    %v2007 = vpow.pop %v2006
    %v2008 = vadd.f32 %v2007, 1.0
    %v2009 = vrcp.pop %v2008
    %v2010 = vmul.f32 1.0, %v2009
    %v2011 = vtanh.pop %v2004
    %v2013 = vrot.slane %v1918, 6
    %v2015 = vmul.f32 %v2010, %v2013
    %2017 = vrot.lane.b32.xlu0 %v2011, 32
    %v2018 = vpop.permute.xlu0 %2017
    %v2020 = vmul.f32 %v2010, %v2018
    %2022 = vrot.lane.b32.xlu0 %v2020, 32
    %v2023 = vpop.permute.xlu0 %2022
    %v2025 = vadd.f32 %v2015, %v2023
    %v2026 = vtanh.pop %v2025
    %2028 = vrot.lane.b32.xlu0 %v2026, 32
    %v2029 = vpop.permute.xlu0 %2028
    %v2031 = vmul.f32 %v2010, %v2029
    %v2033 = vrot.slane %v2031, 4
    %2034 = vrot.lane.b32.xlu0 %v2033, 64
    %v2035 = vpop.permute.xlu0 %2034
    %v2036 = vsel %vm1296, %v2035, 0
    %2038 = vmatprep.subr.mxu0 0.0
    %2039 = vmatpush1.msra.mxu0 %v1292
    %2040 = vmatprep.subr.mxu0 0.0
    %2041 = vmatpush1.msra.mxu0 %v1293
    %2042 = vmatprep.subr.mxu0 0.0
    %2043 = vmatpush1.msra.mxu0 %v1294
    %2044 = vmatprep.subr.mxu0 0.0
    %2045 = vmatpush1.msra.mxu0 %v1295
    %2046 = vmatprep.subr.mxu0 0.0
    %2047 = vmatpush1.msra.mxu0 0.0
    %2048 = vmatprep.subr.mxu0 0.0
    %2049 = vmatpush1.msra.mxu0 0.0
    %2050 = vmatprep.subr.mxu0 0.0
    %2051 = vmatpush1.msra.mxu0 0.0
    %2052 = vmatprep.subr.mxu0 0.0
    %2053 = vmatpush1.msra.mxu0 0.0
    %2054 = vmatprep.subr.mxu0 0.0
    %2055 = vmatpush1.msra.mxu0 0.0
    %2056 = vmatprep.subr.mxu0 0.0
    %2057 = vmatpush1.msra.mxu0 0.0
    %2058 = vmatprep.subr.mxu0 0.0
    %2059 = vmatpush1.msra.mxu0 0.0
    %2060 = vmatprep.subr.mxu0 0.0
    %2061 = vmatpush1.msra.mxu0 0.0
    %2062 = vmatprep.subr.mxu0 0.0
    %2063 = vmatpush1.msra.mxu0 0.0
    %2064 = vmatprep.subr.mxu0 0.0
    %2065 = vmatpush1.msra.mxu0 0.0
    %2066 = vmatprep.subr.mxu0 0.0
    %2067 = vmatpush1.msra.mxu0 0.0
    %2068 = vmatprep.subr.mxu0 0.0
    %2069 = vmatpush1.msra.mxu0 0.0
    %2070 = vmatprep.subr.mxu0 0.0
    %2071 = vmatpush1.msra.mxu0 0.0
    %2072 = vmatprep.subr.mxu0 0.0
    %2073 = vmatpush1.msra.mxu0 0.0
    %2074 = vmatprep.subr.mxu0 0.0
    %2075 = vmatpush1.msra.mxu0 0.0
    %2076 = vmatprep.subr.mxu0 0.0
    %2077 = vmatpush1.msra.mxu0 0.0
    %2078 = vmatprep.subr.mxu0 0.0
    %2079 = vmatpush1.msra.mxu0 0.0
    %2080 = vmatprep.subr.mxu0 0.0
    %2081 = vmatpush1.msra.mxu0 0.0
    %2082 = vmatprep.subr.mxu0 0.0
    %2083 = vmatpush1.msra.mxu0 0.0
    %2084 = vmatprep.subr.mxu0 0.0
    %2085 = vmatpush1.msra.mxu0 0.0
    %2086 = vmatprep.subr.mxu0 0.0
    %2087 = vmatpush1.msra.mxu0 0.0
    %2088 = vmatprep.subr.mxu0 0.0
    %2089 = vmatpush1.msra.mxu0 0.0
    %2090 = vmatprep.subr.mxu0 0.0
    %2091 = vmatpush1.msra.mxu0 0.0
    %2092 = vmatprep.subr.mxu0 0.0
    %2093 = vmatpush1.msra.mxu0 0.0
    %2094 = vmatprep.subr.mxu0 0.0
    %2095 = vmatpush1.msra.mxu0 0.0
    %2096 = vmatprep.subr.mxu0 0.0
    %2097 = vmatpush1.msra.mxu0 0.0
    %2098 = vmatprep.subr.mxu0 0.0
    %2099 = vmatpush1.msra.mxu0 0.0
    %2100 = vmatprep.subr.mxu0 0.0
    %2101 = vmatpush1.msra.mxu0 0.0
    %2102 = vmatprep.mubr.f32.mxu0 0.0
    %2103 = vmatmul.mubr.f32.gmra.mrb[0].mxu0 %v2036
    %v2104 = vpop.f32.mrb[0].mxu0
    %v2105 = vadd.f32 0.0, %v2104
    %v2106 = vpop.f32.mrb[0].mxu0
    %2107 = vdwg.mxu0
    %v2109 = vrot.slane %v2105, 2
    %v2111 = vadd.f32 %v1289, %v2109
    %v2112 = vxor.u32 %v2111, 2147483648
    %v2113 = vmul.f32 %v2112, 1.442695
    %v2114 = vpow.pop %v2113
    %v2115 = vadd.f32 %v2114, 1.0
    %v2116 = vrcp.pop %v2115
    %v2117 = vmul.f32 1.0, %v2116
    %v2118 = vtanh.pop %v2111
    %v2120 = vrot.slane %v2025, 6
    %v2122 = vmul.f32 %v2117, %v2120
    %2124 = vrot.lane.b32.xlu0 %v2118, 32
    %v2125 = vpop.permute.xlu0 %2124
    %v2127 = vmul.f32 %v2117, %v2125
    %2129 = vrot.lane.b32.xlu0 %v2127, 32
    %v2130 = vpop.permute.xlu0 %2129
    %v2132 = vadd.f32 %v2122, %v2130
    %v2133 = vtanh.pop %v2132
    %2135 = vrot.lane.b32.xlu0 %v2133, 32
    %v2136 = vpop.permute.xlu0 %2135
    %v2138 = vmul.f32 %v2117, %v2136
    %2140 = vrot.lane.b32.xlu0 %v2138, 64
    %v2141 = vpop.permute.xlu0 %2140
    %v2144 = vrot.slane %v1175, 2
    %2145 = vrot.lane.b32.xlu0 %v2144, 32
    %v2146 = vpop.permute.xlu0 %2145
    %v2148 = vsel %vm1296, %v2141, %v2146
    %v2149 = vld [vmem:[%s11] sm:$0xff]
    %v2150 = vld [vmem:[%s11 + $0x8] sm:$0xff]
    %v2151 = vld [vmem:[%s11 + $0x10] sm:$0xff]
    %v2152 = vld [vmem:[%s11 + $0x18] sm:$0xff]
    %v2153 = vld [vmem:[%s11 + $0x20] sm:$0xff]
    %v2154 = vld [vmem:[%s12] sm:$0x1]
    %v2156 = vlaneseq
    %v2157 = vshrl.u32 %v2156, 7
    %v2158 = vsub.s32 0, %v2157
    %v2159 = vrot.slane %v2154, %v2158
    %v2162 = vrot.slane %v2148, 6
    %vm2163 = vcmask 326656
    %v2164 = vsel %vm2163, %v2162, 0
    %2166 = vmatprep.subr.mxu0 0.0
    %2167 = vmatpush1.msra.mxu0 %v2149
    %2168 = vmatprep.subr.mxu0 0.0
    %2169 = vmatpush1.msra.mxu0 %v2150
    %2170 = vmatprep.subr.mxu0 0.0
    %2171 = vmatpush1.msra.mxu0 %v2151
    %2172 = vmatprep.subr.mxu0 0.0
    %2173 = vmatpush1.msra.mxu0 %v2152
    %2174 = vmatprep.subr.mxu0 0.0
    %2175 = vmatpush1.msra.mxu0 %v2153
    %2176 = vmatprep.subr.mxu0 0.0
    %2177 = vmatpush1.msra.mxu0 0.0
    %2178 = vmatprep.subr.mxu0 0.0
    %2179 = vmatpush1.msra.mxu0 0.0
    %2180 = vmatprep.subr.mxu0 0.0
    %2181 = vmatpush1.msra.mxu0 0.0
    %2182 = vmatprep.subr.mxu0 0.0
    %2183 = vmatpush1.msra.mxu0 0.0
    %2184 = vmatprep.subr.mxu0 0.0
    %2185 = vmatpush1.msra.mxu0 0.0
    %2186 = vmatprep.subr.mxu0 0.0
    %2187 = vmatpush1.msra.mxu0 0.0
    %2188 = vmatprep.subr.mxu0 0.0
    %2189 = vmatpush1.msra.mxu0 0.0
    %2190 = vmatprep.subr.mxu0 0.0
    %2191 = vmatpush1.msra.mxu0 0.0
    %2192 = vmatprep.subr.mxu0 0.0
    %2193 = vmatpush1.msra.mxu0 0.0
    %2194 = vmatprep.subr.mxu0 0.0
    %2195 = vmatpush1.msra.mxu0 0.0
    %2196 = vmatprep.subr.mxu0 0.0
    %2197 = vmatpush1.msra.mxu0 0.0
    %2198 = vmatprep.subr.mxu0 0.0
    %2199 = vmatpush1.msra.mxu0 0.0
    %2200 = vmatprep.subr.mxu0 0.0
    %2201 = vmatpush1.msra.mxu0 0.0
    %2202 = vmatprep.subr.mxu0 0.0
    %2203 = vmatpush1.msra.mxu0 0.0
    %2204 = vmatprep.subr.mxu0 0.0
    %2205 = vmatpush1.msra.mxu0 0.0
    %2206 = vmatprep.subr.mxu0 0.0
    %2207 = vmatpush1.msra.mxu0 0.0
    %2208 = vmatprep.subr.mxu0 0.0
    %2209 = vmatpush1.msra.mxu0 0.0
    %2210 = vmatprep.subr.mxu0 0.0
    %2211 = vmatpush1.msra.mxu0 0.0
    %2212 = vmatprep.subr.mxu0 0.0
    %2213 = vmatpush1.msra.mxu0 0.0
    %2214 = vmatprep.subr.mxu0 0.0
    %2215 = vmatpush1.msra.mxu0 0.0
    %2216 = vmatprep.subr.mxu0 0.0
    %2217 = vmatpush1.msra.mxu0 0.0
    %2218 = vmatprep.subr.mxu0 0.0
    %2219 = vmatpush1.msra.mxu0 0.0
    %2220 = vmatprep.subr.mxu0 0.0
    %2221 = vmatpush1.msra.mxu0 0.0
    %2222 = vmatprep.subr.mxu0 0.0
    %2223 = vmatpush1.msra.mxu0 0.0
    %2224 = vmatprep.subr.mxu0 0.0
    %2225 = vmatpush1.msra.mxu0 0.0
    %2226 = vmatprep.subr.mxu0 0.0
    %2227 = vmatpush1.msra.mxu0 0.0
    %2228 = vmatprep.subr.mxu0 0.0
    %2229 = vmatpush1.msra.mxu0 0.0
    %2230 = vmatprep.mubr.f32.mxu0 0.0
    %2231 = vmatmul.mubr.f32.gmra.mrb[0].mxu0 %v2164
    %v2232 = vpop.f32.mrb[0].mxu0
    %v2233 = vadd.f32 %v2159, %v2232
    %v2234 = vpop.f32.mrb[0].mxu0
    %2235 = vdwg.mxu0
    %v2236 = vmax.f32 %v2233, 0.0
    %v2237 = vld [vmem:[%s13] sm:$0xff]
    %v2238 = vld [vmem:[%s13 + $0x8] sm:$0xff]
    %v2239 = vld [vmem:[%s14] sm:$0x1]
    %v2241 = vlaneseq
    %v2242 = vshrl.u32 %v2241, 7
    %v2243 = vsub.s32 0, %v2242
    %v2244 = vrot.slane %v2239, %v2243
    %v2247 = vsel %vm1197, %v2236, 0
    %2249 = vmatprep.subr.mxu0 0.0
    %2250 = vmatpush1.msra.mxu0 %v2237
    %2251 = vmatprep.subr.mxu0 0.0
    %2252 = vmatpush1.msra.mxu0 %v2238
    %2253 = vmatprep.subr.mxu0 0.0
    %2254 = vmatpush1.msra.mxu0 0.0
    %2255 = vmatprep.subr.mxu0 0.0
    %2256 = vmatpush1.msra.mxu0 0.0
    %2257 = vmatprep.subr.mxu0 0.0
    %2258 = vmatpush1.msra.mxu0 0.0
    %2259 = vmatprep.subr.mxu0 0.0
    %2260 = vmatpush1.msra.mxu0 0.0
    %2261 = vmatprep.subr.mxu0 0.0
    %2262 = vmatpush1.msra.mxu0 0.0
    %2263 = vmatprep.subr.mxu0 0.0
    %2264 = vmatpush1.msra.mxu0 0.0
    %2265 = vmatprep.subr.mxu0 0.0
    %2266 = vmatpush1.msra.mxu0 0.0
    %2267 = vmatprep.subr.mxu0 0.0
    %2268 = vmatpush1.msra.mxu0 0.0
    %2269 = vmatprep.subr.mxu0 0.0
    %2270 = vmatpush1.msra.mxu0 0.0
    %2271 = vmatprep.subr.mxu0 0.0
    %2272 = vmatpush1.msra.mxu0 0.0
    %2273 = vmatprep.subr.mxu0 0.0
    %2274 = vmatpush1.msra.mxu0 0.0
    %2275 = vmatprep.subr.mxu0 0.0
    %2276 = vmatpush1.msra.mxu0 0.0
    %2277 = vmatprep.subr.mxu0 0.0
    %2278 = vmatpush1.msra.mxu0 0.0
    %2279 = vmatprep.subr.mxu0 0.0
    %2280 = vmatpush1.msra.mxu0 0.0
    %2281 = vmatprep.subr.mxu0 0.0
    %2282 = vmatpush1.msra.mxu0 0.0
    %2283 = vmatprep.subr.mxu0 0.0
    %2284 = vmatpush1.msra.mxu0 0.0
    %2285 = vmatprep.subr.mxu0 0.0
    %2286 = vmatpush1.msra.mxu0 0.0
    %2287 = vmatprep.subr.mxu0 0.0
    %2288 = vmatpush1.msra.mxu0 0.0
    %2289 = vmatprep.subr.mxu0 0.0
    %2290 = vmatpush1.msra.mxu0 0.0
    %2291 = vmatprep.subr.mxu0 0.0
    %2292 = vmatpush1.msra.mxu0 0.0
    %2293 = vmatprep.subr.mxu0 0.0
    %2294 = vmatpush1.msra.mxu0 0.0
    %2295 = vmatprep.subr.mxu0 0.0
    %2296 = vmatpush1.msra.mxu0 0.0
    %2297 = vmatprep.subr.mxu0 0.0
    %2298 = vmatpush1.msra.mxu0 0.0
    %2299 = vmatprep.subr.mxu0 0.0
    %2300 = vmatpush1.msra.mxu0 0.0
    %2301 = vmatprep.subr.mxu0 0.0
    %2302 = vmatpush1.msra.mxu0 0.0
    %2303 = vmatprep.subr.mxu0 0.0
    %2304 = vmatpush1.msra.mxu0 0.0
    %2305 = vmatprep.subr.mxu0 0.0
    %2306 = vmatpush1.msra.mxu0 0.0
    %2307 = vmatprep.subr.mxu0 0.0
    %2308 = vmatpush1.msra.mxu0 0.0
    %2309 = vmatprep.subr.mxu0 0.0
    %2310 = vmatpush1.msra.mxu0 0.0
    %2311 = vmatprep.subr.mxu0 0.0
    %2312 = vmatpush1.msra.mxu0 0.0
    %2313 = vmatprep.mubr.f32.mxu0 0.0
    %2314 = vmatmul.mubr.f32.gmra.mrb[0].mxu0 %v2247
    %v2315 = vpop.f32.mrb[0].mxu0
    %v2316 = vadd.f32 %v2244, %v2315
    %v2317 = vpop.f32.mrb[0].mxu0
    %2318 = vdwg.mxu0
    %2319 = vst [vmem:[#allocation2] sm:$0x3] %v2316
    // Predicated region
    $region62: #{lstmnet_forward.1} parent=1 // pred_check
      _
    $region63: #{lstmnet_forward.1} parent=1 // pred_check_branch
      %2321 = sbr.rel (0) target = $region65
    $region64: #{lstmnet_forward.1} parent=1 // pred_region
      %s2323 = ssub.s32 32, 32
      %2324 = vsyncadd [#allocation3], %s2323
      %s2326 = sshll.u32 [#allocation2], 4
      %s2327 = int_to_ptr.vmem [resolvable:$true] %s2326
      %2329 = dma.vmem_to_hbm [thread:$0]  %s2327, 32, %s15, [#allocation3]
    $region65: #{lstmnet_forward.1} parent=1 // pred_fallthru
      _
    // Predicated region
    $region66: #{lstmnet_forward.1} parent=1 // pred_check
      _
    $region67: #{lstmnet_forward.1} parent=1 // pred_check_branch
      %2331 = sbr.rel (0) target = $region69
    $region68: #{lstmnet_forward.1} parent=1 // pred_region
      %2332 = dma.done [#allocation3], 32
    $region69: #{lstmnet_forward.1} parent=1 // pred_fallthru
      _
    %2333 = vsyncpa [#allocation3], 1

</llo_original>
